<compile_context>
chip_gen: v5e
topology: v5e:2x2
jax: 0.10.0
libtpu: 0.0.40
codegen_flags: <defaults>
</compile_context>

<pallas_src>
import math

import jax
import jax.numpy as jnp
from jax.experimental import pallas as pl
from jax.experimental.pallas import tpu as pltpu


def _round_up(x, m):
    return (x + m - 1) // m * m


def _cdiv(a, b):
    return (a + b - 1) // b


def _vmem_capacity_bytes():
    try:
        info = pltpu.get_tpu_info()
        cap = getattr(info, "vmem_capacity_bytes", None)
        if cap:
            return int(cap)
    except Exception:
        pass
    return 64 * 1024 * 1024  # conservative (v7x physical VMEM per core)


def conv_relu_kernel(x_ref, w_ref, b_ref, o_ref, patch_ref):
    # x_ref:     (1, H_pad+2, W+2, Cin)  padded input, resident per batch element
    # w_ref:     (Kp, TC)                densely packed im2col weights
    # b_ref:     (1, TC)                 bias (f32)
    # o_ref:     (1, TH*W, TC)           flat output row-tile x Cout-tile
    # patch_ref: (TH, W, Kp)             VMEM scratch: im2col patch
    TH, W, Kp = patch_ref.shape
    Cin = x_ref.shape[3]
    K = 9 * Cin                 # dense (unpadded) contraction length
    M = TH * W

    h = pl.program_id(1)        # row-tile index
    c = pl.program_id(2)        # Cout-tile index (innermost, "arbitrary")

    # Build the im2col patch only once per (n, h); reuse it across all c tiles.
    # c is the innermost grid axis and marked "arbitrary", so every core's first
    # visit to a given (n, h) has c == 0 even under megacore partitioning.
    @pl.when(c == 0)
    def _build_patch():
        # Zero only the K-pad lanes so stale VMEM (NaN/Inf) times the zero
        # weight rows cannot poison the matmul.  Static branch: skipped when
        # 9*Cin is already a multiple of 128.
        if Kp != K:
            patch_ref[:, :, K:] = jnp.zeros((TH, W, Kp - K), patch_ref.dtype)
        r0 = h * TH
        for kh in range(3):
            for kw in range(3):
                off = (kh * 3 + kw) * Cin
                # Direct (TH, W, Cin) store into the dense tap slot; no reshape.
                patch_ref[:, :, off:off + Cin] = (
                    x_ref[0, pl.ds(r0 + kh, TH), kw:kw + W, :])

    # Single MXU matmul over the dense K with f32 accumulation.  The reshape is
    # a contiguous leading-dims merge of the scratch (free for W % 8 == 0).
    acc = jnp.dot(patch_ref[...].reshape(M, Kp), w_ref[...],
                  preferred_element_type=jnp.float32)            # (M, TC) f32

    # Epilogue in f32: bias add + ReLU, cast on the store.
    acc = jnp.maximum(acc + b_ref[...], 0.0)
    o_ref[0] = acc.astype(o_ref.dtype)


def conv_relu_pallas(x_nchw, weight, bias, *, compute_dtype=jnp.bfloat16,
                     m_target=2048):
    """Conv2d(kernel=3, stride=1, padding=1) + ReLU.

    x_nchw: (N, Cin, H, W); weight: (Cout, Cin, 3, 3); bias: (Cout,).
    Returns (N, Cout, H, W) in x's dtype (PyTorch ConvRelu semantics).
    compute_dtype: dtype fed to the MXU (bf16 by default; accumulation and the
                   bias/ReLU epilogue are always f32).
    """
    N, Cin, H, W = x_nchw.shape
    Cout = weight.shape[0]
    out_dtype = x_nchw.dtype
    cdt = jnp.dtype(compute_dtype)
    c_it = cdt.itemsize
    o_it = jnp.dtype(out_dtype).itemsize

    # ---- tiling ------------------------------------------------------------
    Kp = _round_up(9 * Cin, 128)                 # densely packed, lane-padded K
    if Cout < 128 or Cout % 128 == 0:
        C_lanes = Cout                           # small Cout: no HBM write ampl.
    else:
        C_lanes = _round_up(Cout, 128)           # lane-dense stores otherwise

    cap = _vmem_capacity_bytes()
    budget = cap - 8 * 1024 * 1024               # leave compiler headroom

    # Row tile: target ~m_target matmul rows, keep TH*W a multiple of 8 so the
    # (1, TH*W, TC) output block obeys the sublane rule; H is padded to TH*H_t.
    step = 8 // math.gcd(W, 8)
    TH = max(step, (max(1, m_target // W)) // step * step)
    TH = min(TH, _round_up(H, step))

    def vmem_needed(th, tc):
        hp = _cdiv(H, th) * th
        return (2 * (hp + 2) * (W + 2) * Cin * c_it      # resident input (x2 buf)
                + 2 * Kp * tc * c_it                     # weight tile
                + 2 * tc * 4                             # bias tile
                + 2 * th * W * tc * o_it                 # output tile
                + th * _round_up(W, 8) * Kp * c_it       # im2col scratch
                + th * W * tc * 4)                       # f32 accumulator

    # Cout tile: prefer the whole padded Cout (single c tile -> im2col built
    # exactly once per row tile); fall back to smaller 128-multiples if needed.
    if C_lanes % 128 == 0:
        tc_cands = [t for t in range(C_lanes, 0, -128) if C_lanes % t == 0]
    else:
        tc_cands = [C_lanes]
    TC = tc_cands[-1]
    for t in tc_cands:
        if vmem_needed(TH, t) <= budget:
            TC = t
            break
    while vmem_needed(TH, TC) > budget and TH > step:
        TH = max(step, (TH // 2) // step * step)

    H_t = _cdiv(H, TH)
    H_pad = H_t * TH
    C_t = C_lanes // TC
    grid = (N, H_t, C_t)

    # ---- operand layout (wrapper-side; XLA fuses these into single copies) --
    # NCHW -> NHWC, 1px conv halo + bottom pad up to the row-tile multiple.
    x = jnp.transpose(x_nchw, (0, 2, 3, 1)).astype(cdt)
    x = jnp.pad(x, ((0, 0), (1, 1 + H_pad - H), (1, 1), (0, 0)))

    # (Cout,Cin,3,3) -> (3,3,Cin,Cout) -> (9*Cin, Cout); pad K and Cout (zeros).
    w = jnp.transpose(weight, (2, 3, 1, 0)).astype(cdt).reshape(9 * Cin, Cout)
    w = jnp.pad(w, ((0, Kp - 9 * Cin), (0, C_lanes - Cout)))

    b = jnp.pad(bias.astype(jnp.float32), (0, C_lanes - Cout)).reshape(1, C_lanes)

    needed = vmem_needed(TH, TC)
    vmem_limit = int(min(max(int(needed * 1.5) + (4 << 20), 32 << 20), budget))

    out_flat = pl.pallas_call(
        conv_relu_kernel,
        out_shape=jax.ShapeDtypeStruct((N, H_pad * W, C_lanes), out_dtype),
        grid_spec=pltpu.PrefetchScalarGridSpec(
            num_scalar_prefetch=0,
            grid=grid,
            in_specs=[
                # Full padded image per batch element; resident across (h, c).
                pl.BlockSpec((1, H_pad + 2, W + 2, Cin),
                             lambda n, h, c: (n, 0, 0, 0)),
                # Weight / bias tiles depend only on the Cout-tile index.
                pl.BlockSpec((Kp, TC), lambda n, h, c: (0, c)),
                pl.BlockSpec((1, TC), lambda n, h, c: (0, c)),
            ],
            out_specs=pl.BlockSpec((1, TH * W, TC), lambda n, h, c: (n, h, c)),
            scratch_shapes=[pltpu.VMEM((TH, W, Kp), cdt)],
        ),
        compiler_params=pltpu.CompilerParams(
            # c must stay "arbitrary": the im2col patch is built at c == 0 and
            # reused for the remaining Cout tiles of the same rows.
            dimension_semantics=("parallel", "parallel", "arbitrary"),
            vmem_limit_bytes=vmem_limit,
        ),
    )(x, w, b)

    # Flat rows -> (H, W), drop row/channel padding, NHWC -> NCHW (torch parity).
    out = out_flat.reshape(N, H_pad, W, C_lanes)[:, :H, :, :Cout]
    return jnp.transpose(out, (0, 3, 1, 2))


if __name__ == "__main__":
    key = jax.random.PRNGKey(0)
    k_x, k_w, k_b = jax.random.split(key, 3)

    N, Cin, H, W = 2, 4, 16, 16
    Cout = 8

    x = jax.random.normal(k_x, (N, Cin, H, W), dtype=jnp.float32)
    # Deterministic parameter init (same shapes as nn.Conv2d(in, out, 3)).
    fan_in = Cin * 3 * 3
    bound = 1.0 / (fan_in ** 0.5)
    weight = jax.random.uniform(k_w, (Cout, Cin, 3, 3), jnp.float32,
                                minval=-bound, maxval=bound)
    bias = jax.random.uniform(k_b, (Cout,), jnp.float32,
                              minval=-bound, maxval=bound)

    # Plain-JAX reference: conv(3x3, s=1, p=1) + bias + ReLU.
    ref = jax.lax.conv_general_dilated(
        x, weight, window_strides=(1, 1), padding=((1, 1), (1, 1)),
        dimension_numbers=("NCHW", "OIHW", "NCHW"),
        precision=jax.lax.Precision.HIGHEST)
    ref = jnp.maximum(ref + bias[None, :, None, None], 0.0)

    # f32 MXU path: tight check.
    out_f32 = jax.block_until_ready(
        conv_relu_pallas(x, weight, bias, compute_dtype=jnp.float32))
    assert out_f32.shape == (N, Cout, H, W)
    assert out_f32.dtype == x.dtype
    assert jnp.allclose(out_f32, ref, atol=2e-3, rtol=2e-3)

    # Default bf16 MXU path (recommended on v5e/v6e/v7x): loose check.
    out_bf16 = jax.block_until_ready(conv_relu_pallas(x, weight, bias))
    assert out_bf16.shape == (N, Cout, H, W)
    assert out_bf16.dtype == x.dtype
    assert jnp.allclose(out_bf16, ref, atol=5e-2, rtol=5e-2)

    print("KERNEL_OK")
</pallas_src>

<mosaic_0001>
module attributes {stable_mosaic.version = 11 : i64} {
  func.func @conv_relu_kernel(%arg0: i32, %arg1: i32, %arg2: i32, %arg3: memref<1x18x18x4xf32, #tpu.memory_space<vmem>>, %arg4: memref<128x8xf32, #tpu.memory_space<vmem>>, %arg5: memref<1x8xf32, #tpu.memory_space<vmem>>, %arg6: memref<1x256x8xf32, #tpu.memory_space<vmem>>, %arg7: memref<16x16x128xf32, #tpu.memory_space<vmem>>) attributes {dimension_semantics = [#tpu.dimension_semantics<parallel>, #tpu.dimension_semantics<parallel>, #tpu.dimension_semantics<arbitrary>], iteration_bounds = array<i64: 2, 1, 1>, scalar_prefetch = 0 : i64, scratch_operands = 1 : i64, tpu.core_type = #tpu.core_type<tc>, window_params = [{transform_indices = @transform_0, window_bounds = array<i64: 1, 18, 18, 4>}, {transform_indices = @transform_1, window_bounds = array<i64: 128, 8>}, {transform_indices = @transform_2, window_bounds = array<i64: 1, 8>}, {transform_indices = @transform_3, window_bounds = array<i64: 1, 256, 8>}]} {
    %c0_i32 = arith.constant 0 : i32
    %0 = arith.cmpi eq, %arg2, %c0_i32 : i32
    %1 = arith.extui %0 : i1 to i32
    %c0_i32_0 = arith.constant 0 : i32
    %2 = arith.cmpi ne, %1, %c0_i32_0 : i32
    scf.if %2 {
      %cst_11 = arith.constant 0.000000e+00 : f32
      %15 = vector.broadcast %cst_11 : f32 to vector<16x16x92xf32>
      %c0_12 = arith.constant 0 : index
      %c0_13 = arith.constant 0 : index
      %c36 = arith.constant 36 : index
      %16 = vector.load %arg7[%c0_12, %c0_13, %c36] : memref<16x16x128xf32, #tpu.memory_space<vmem>>, vector<16x16x92xf32>
      tpu.vector_store %arg7[%c0_12, %c0_13, %c36], %15 {strides = array<i32>} : memref<16x16x128xf32, #tpu.memory_space<vmem>>, vector<16x16x92xf32>,
      %c16_i32 = arith.constant 16 : i32
      %17 = arith.muli %arg1, %c16_i32 : i32
      %c0_i32_14 = arith.constant 0 : i32
      %18 = arith.addi %17, %c0_i32_14 : i32
      %c0_15 = arith.constant 0 : index
      %19 = arith.index_cast %18 : i32 to index
      %c0_16 = arith.constant 0 : index
      %c0_17 = arith.constant 0 : index
      %20 = vector.load %arg3[%c0_15, %19, %c0_16, %c0_17] : memref<1x18x18x4xf32, #tpu.memory_space<vmem>>, vector<1x16x16x4xf32>
      %21 = vector.shape_cast %20 : vector<1x16x16x4xf32> to vector<16x16x4xf32>
      %c0_18 = arith.constant 0 : index
      %c0_19 = arith.constant 0 : index
      %c0_20 = arith.constant 0 : index
      %22 = vector.load %arg7[%c0_18, %c0_19, %c0_20] : memref<16x16x128xf32, #tpu.memory_space<vmem>>, vector<16x16x4xf32>
      tpu.vector_store %arg7[%c0_18, %c0_19, %c0_20], %21 {strides = array<i32>} : memref<16x16x128xf32, #tpu.memory_space<vmem>>, vector<16x16x4xf32>,
      %c0_i32_21 = arith.constant 0 : i32
      %23 = arith.addi %17, %c0_i32_21 : i32
      %c0_22 = arith.constant 0 : index
      %24 = arith.index_cast %23 : i32 to index
      %c1 = arith.constant 1 : index
      %c0_23 = arith.constant 0 : index
      %25 = vector.load %arg3[%c0_22, %24, %c1, %c0_23] : memref<1x18x18x4xf32, #tpu.memory_space<vmem>>, vector<1x16x16x4xf32>
      %26 = vector.shape_cast %25 : vector<1x16x16x4xf32> to vector<16x16x4xf32>
      %c0_24 = arith.constant 0 : index
      %c0_25 = arith.constant 0 : index
      %c4 = arith.constant 4 : index
      %27 = vector.load %arg7[%c0_24, %c0_25, %c4] : memref<16x16x128xf32, #tpu.memory_space<vmem>>, vector<16x16x4xf32>
      tpu.vector_store %arg7[%c0_24, %c0_25, %c4], %26 {strides = array<i32>} : memref<16x16x128xf32, #tpu.memory_space<vmem>>, vector<16x16x4xf32>,
      %c0_i32_26 = arith.constant 0 : i32
      %28 = arith.addi %17, %c0_i32_26 : i32
      %c0_27 = arith.constant 0 : index
      %29 = arith.index_cast %28 : i32 to index
      %c2 = arith.constant 2 : index
      %c0_28 = arith.constant 0 : index
      %30 = vector.load %arg3[%c0_27, %29, %c2, %c0_28] : memref<1x18x18x4xf32, #tpu.memory_space<vmem>>, vector<1x16x16x4xf32>
      %31 = vector.shape_cast %30 : vector<1x16x16x4xf32> to vector<16x16x4xf32>
      %c0_29 = arith.constant 0 : index
      %c0_30 = arith.constant 0 : index
      %c8 = arith.constant 8 : index
      %32 = vector.load %arg7[%c0_29, %c0_30, %c8] : memref<16x16x128xf32, #tpu.memory_space<vmem>>, vector<16x16x4xf32>
      tpu.vector_store %arg7[%c0_29, %c0_30, %c8], %31 {strides = array<i32>} : memref<16x16x128xf32, #tpu.memory_space<vmem>>, vector<16x16x4xf32>,
      %c1_i32 = arith.constant 1 : i32
      %33 = arith.addi %17, %c1_i32 : i32
      %c0_31 = arith.constant 0 : index
      %34 = arith.index_cast %33 : i32 to index
      %c0_32 = arith.constant 0 : index
      %c0_33 = arith.constant 0 : index
      %35 = vector.load %arg3[%c0_31, %34, %c0_32, %c0_33] : memref<1x18x18x4xf32, #tpu.memory_space<vmem>>, vector<1x16x16x4xf32>
      %36 = vector.shape_cast %35 : vector<1x16x16x4xf32> to vector<16x16x4xf32>
      %c0_34 = arith.constant 0 : index
      %c0_35 = arith.constant 0 : index
      %c12 = arith.constant 12 : index
      %37 = vector.load %arg7[%c0_34, %c0_35, %c12] : memref<16x16x128xf32, #tpu.memory_space<vmem>>, vector<16x16x4xf32>
      tpu.vector_store %arg7[%c0_34, %c0_35, %c12], %36 {strides = array<i32>} : memref<16x16x128xf32, #tpu.memory_space<vmem>>, vector<16x16x4xf32>,
      %c1_i32_36 = arith.constant 1 : i32
      %38 = arith.addi %17, %c1_i32_36 : i32
      %c0_37 = arith.constant 0 : index
      %39 = arith.index_cast %38 : i32 to index
      %c1_38 = arith.constant 1 : index
      %c0_39 = arith.constant 0 : index
      %40 = vector.load %arg3[%c0_37, %39, %c1_38, %c0_39] : memref<1x18x18x4xf32, #tpu.memory_space<vmem>>, vector<1x16x16x4xf32>
      %41 = vector.shape_cast %40 : vector<1x16x16x4xf32> to vector<16x16x4xf32>
      %c0_40 = arith.constant 0 : index
      %c0_41 = arith.constant 0 : index
      %c16 = arith.constant 16 : index
      %42 = vector.load %arg7[%c0_40, %c0_41, %c16] : memref<16x16x128xf32, #tpu.memory_space<vmem>>, vector<16x16x4xf32>
      tpu.vector_store %arg7[%c0_40, %c0_41, %c16], %41 {strides = array<i32>} : memref<16x16x128xf32, #tpu.memory_space<vmem>>, vector<16x16x4xf32>,
      %c1_i32_42 = arith.constant 1 : i32
      %43 = arith.addi %17, %c1_i32_42 : i32
      %c0_43 = arith.constant 0 : index
      %44 = arith.index_cast %43 : i32 to index
      %c2_44 = arith.constant 2 : index
      %c0_45 = arith.constant 0 : index
      %45 = vector.load %arg3[%c0_43, %44, %c2_44, %c0_45] : memref<1x18x18x4xf32, #tpu.memory_space<vmem>>, vector<1x16x16x4xf32>
      %46 = vector.shape_cast %45 : vector<1x16x16x4xf32> to vector<16x16x4xf32>
      %c0_46 = arith.constant 0 : index
      %c0_47 = arith.constant 0 : index
      %c20 = arith.constant 20 : index
      %47 = vector.load %arg7[%c0_46, %c0_47, %c20] : memref<16x16x128xf32, #tpu.memory_space<vmem>>, vector<16x16x4xf32>
      tpu.vector_store %arg7[%c0_46, %c0_47, %c20], %46 {strides = array<i32>} : memref<16x16x128xf32, #tpu.memory_space<vmem>>, vector<16x16x4xf32>,
      %c2_i32 = arith.constant 2 : i32
      %48 = arith.addi %17, %c2_i32 : i32
      %c0_48 = arith.constant 0 : index
      %49 = arith.index_cast %48 : i32 to index
      %c0_49 = arith.constant 0 : index
      %c0_50 = arith.constant 0 : index
      %50 = vector.load %arg3[%c0_48, %49, %c0_49, %c0_50] : memref<1x18x18x4xf32, #tpu.memory_space<vmem>>, vector<1x16x16x4xf32>
      %51 = vector.shape_cast %50 : vector<1x16x16x4xf32> to vector<16x16x4xf32>
      %c0_51 = arith.constant 0 : index
      %c0_52 = arith.constant 0 : index
      %c24 = arith.constant 24 : index
      %52 = vector.load %arg7[%c0_51, %c0_52, %c24] : memref<16x16x128xf32, #tpu.memory_space<vmem>>, vector<16x16x4xf32>
      tpu.vector_store %arg7[%c0_51, %c0_52, %c24], %51 {strides = array<i32>} : memref<16x16x128xf32, #tpu.memory_space<vmem>>, vector<16x16x4xf32>,
      %c2_i32_53 = arith.constant 2 : i32
      %53 = arith.addi %17, %c2_i32_53 : i32
      %c0_54 = arith.constant 0 : index
      %54 = arith.index_cast %53 : i32 to index
      %c1_55 = arith.constant 1 : index
      %c0_56 = arith.constant 0 : index
      %55 = vector.load %arg3[%c0_54, %54, %c1_55, %c0_56] : memref<1x18x18x4xf32, #tpu.memory_space<vmem>>, vector<1x16x16x4xf32>
      %56 = vector.shape_cast %55 : vector<1x16x16x4xf32> to vector<16x16x4xf32>
      %c0_57 = arith.constant 0 : index
      %c0_58 = arith.constant 0 : index
      %c28 = arith.constant 28 : index
      %57 = vector.load %arg7[%c0_57, %c0_58, %c28] : memref<16x16x128xf32, #tpu.memory_space<vmem>>, vector<16x16x4xf32>
      tpu.vector_store %arg7[%c0_57, %c0_58, %c28], %56 {strides = array<i32>} : memref<16x16x128xf32, #tpu.memory_space<vmem>>, vector<16x16x4xf32>,
      %c2_i32_59 = arith.constant 2 : i32
      %58 = arith.addi %17, %c2_i32_59 : i32
      %c0_60 = arith.constant 0 : index
      %59 = arith.index_cast %58 : i32 to index
      %c2_61 = arith.constant 2 : index
      %c0_62 = arith.constant 0 : index
      %60 = vector.load %arg3[%c0_60, %59, %c2_61, %c0_62] : memref<1x18x18x4xf32, #tpu.memory_space<vmem>>, vector<1x16x16x4xf32>
      %61 = vector.shape_cast %60 : vector<1x16x16x4xf32> to vector<16x16x4xf32>
      %c0_63 = arith.constant 0 : index
      %c0_64 = arith.constant 0 : index
      %c32 = arith.constant 32 : index
      %62 = vector.load %arg7[%c0_63, %c0_64, %c32] : memref<16x16x128xf32, #tpu.memory_space<vmem>>, vector<16x16x4xf32>
      tpu.vector_store %arg7[%c0_63, %c0_64, %c32], %61 {strides = array<i32>} : memref<16x16x128xf32, #tpu.memory_space<vmem>>, vector<16x16x4xf32>,
    } else {
    }
    %c0 = arith.constant 0 : index
    %c0_1 = arith.constant 0 : index
    %c0_2 = arith.constant 0 : index
    %3 = vector.load %arg7[%c0, %c0_1, %c0_2] : memref<16x16x128xf32, #tpu.memory_space<vmem>>, vector<16x16x128xf32>
    %4 = vector.shape_cast %3 : vector<16x16x128xf32> to vector<256x128xf32>
    %c0_3 = arith.constant 0 : index
    %c0_4 = arith.constant 0 : index
    %5 = vector.load %arg4[%c0_3, %c0_4] : memref<128x8xf32, #tpu.memory_space<vmem>>, vector<128x8xf32>
    %cst = arith.constant dense<0.000000e+00> : vector<256x8xf32>
    %6 = tpu.matmul %4, %5, %cst {dimension_numbers = #tpu.dot_dimension_numbers<[1], [0], [0], [1], [0, 0, 1, 1], [], []>} : vector<256x128xf32>, vector<128x8xf32>, vector<256x8xf32> -> vector<256x8xf32>
    %c0_5 = arith.constant 0 : index
    %c0_6 = arith.constant 0 : index
    %7 = vector.load %arg5[%c0_5, %c0_6] : memref<1x8xf32, #tpu.memory_space<vmem>>, vector<1x8xf32>
    %8 = vector.broadcast %7 : vector<1x8xf32> to vector<256x8xf32>
    %9 = arith.addf %6, %8 : vector<256x8xf32>
    %cst_7 = arith.constant 0.000000e+00 : f32
    %10 = vector.broadcast %cst_7 : f32 to vector<256x8xf32>
    %11 = arith.maximumf %9, %10 : vector<256x8xf32>
    %c0_8 = arith.constant 0 : index
    %c0_9 = arith.constant 0 : index
    %c0_10 = arith.constant 0 : index
    %12 = vector.load %arg6[%c0_8, %c0_9, %c0_10] : memref<1x256x8xf32, #tpu.memory_space<vmem>>, vector<1x256x8xf32>
    %13 = vector.shape_cast %12 : vector<1x256x8xf32> to vector<256x8xf32>
    %14 = vector.shape_cast %11 : vector<256x8xf32> to vector<1x256x8xf32>
    tpu.vector_store %arg6[%c0_8, %c0_9, %c0_10], %14 {strides = array<i32>} : memref<1x256x8xf32, #tpu.memory_space<vmem>>, vector<1x256x8xf32>,
    return
  }
  func.func @transform_0(%arg0: i32, %arg1: i32, %arg2: i32) -> (i32, i32, i32, i32) {
    %c0_i32 = arith.constant 0 : i32
    %c0_i32_0 = arith.constant 0 : i32
    %c0_i32_1 = arith.constant 0 : i32
    %c0_i32_2 = arith.constant 0 : i32
    return %arg0, %c0_i32, %c0_i32_0, %c0_i32_1 : i32, i32, i32, i32
  }
  func.func @transform_1(%arg0: i32, %arg1: i32, %arg2: i32) -> (i32, i32) {
    %c0_i32 = arith.constant 0 : i32
    %c0_i32_0 = arith.constant 0 : i32
    return %c0_i32, %arg2 : i32, i32
  }
  func.func @transform_2(%arg0: i32, %arg1: i32, %arg2: i32) -> (i32, i32) {
    %c0_i32 = arith.constant 0 : i32
    %c0_i32_0 = arith.constant 0 : i32
    return %c0_i32, %arg2 : i32, i32
  }
  func.func @transform_3(%arg0: i32, %arg1: i32, %arg2: i32) -> (i32, i32, i32) {
    %c0_i32 = arith.constant 0 : i32
    return %arg0, %arg1, %arg2 : i32, i32, i32
  }
}

</mosaic_0001>

<llo_original>
// kernel: tpu_custom_call.1
$region0: #{tpu_custom_call.1}
  #allocation0 [shape = 'u32[]', space=smem, size = 0x4, offset = 0x4, fixed_abs, tag = 'smem constant byte address 0x4 - core index']
  #allocation1 [shape = 'u32[72,128]{1,0:T(1,128)}', space=vmem, size = 0x9000, scoped, tag = 'internal scratch']
  #allocation2 [shape = 'f32[16,16,128]{2,1,0:T(8,128)}', space=vmem, size = 0x20000, scoped, tag = 'scratch operand']
  %s0 = inlined_call_operand.vmem [shape: f32[2,18,18,4], index: 0, kind: input, shape index: {}]
  %s1 = inlined_call_operand.vmem [shape: f32[128,8], index: 1, kind: input, shape index: {}]
  %s2 = inlined_call_operand.vmem [shape: f32[1,8], index: 2, kind: input, shape index: {}]
  %s3 = inlined_call_operand.vmem [shape: f32[2,256,8], index: 3, kind: output, shape index: {}]
  %s4 = sld [smem:[#allocation0]]
  $region49: #{tpu_custom_call.1} parent=0
    _
  %s6 = ssub.s32 1, %s4
  %s7 = scalar_select 0, %s6, %s4
  loop: start=0, step=1, limit=4
  $region2: #{tpu_custom_call.1} parent=0 // loop_pre_header
    _
  $region3: #{tpu_custom_call.1} parent=0 // loop_header
    %s9 = sphi 0, %s13
    %p10 = scmp.ge.s32.totalorder %s9, 4
    %s16 = sphi 0, %s35
    %s17 = sphi 0, %s31
    %s18 = sphi 0, %s27
    %s19 = sphi 0, %s16
    %s20 = sphi 0, %s17
    %s21 = sphi 0, %s18
    %s22 = sphi 0, %s19
    %s23 = sphi 0, %s20
    %s24 = sphi 0, %s21
    %s38 = sphi 0, %s40
    %s41 = sphi 0, %s38
    %s42 = sphi 0, %s41
    %s58 = sphi 0, %s42
    %s64 = sphi 0, %s66
    %s67 = sphi 0, %s64
    %s68 = sphi 0, %s67
    %s84 = sphi 0, %s68
    %s90 = sphi 0, %s92
    %s93 = sphi 0, %s90
    %s94 = sphi 0, %s93
    %s110 = sphi 0, %s94
    %s120 = sphi 0, %s122
    %s123 = sphi 0, %s120
    %s124 = sphi 0, %s123
    %s140 = sphi 0, %s124
  $region4: #{tpu_custom_call.1} parent=0 // loop_header_branch
    %12 = sbr.rel (%p10) target = $region8
  $region5: #{tpu_custom_call.1} parent=0 // loop_body
    %s14 = ssub.s32 %s9, 1
    %s15 = ssub.s32 %s9, 2
    %s25 = sadd.s32 1, %s18
    %p26 = scmp.ge.s32.totalorder %s25, 1
    %s27 = scalar_select %p26, 0, %s25
    %s28 = sadd.s32 1, %s17
    %s29 = scalar_select %p26, %s28, %s17
    %p30 = scmp.ge.s32.totalorder %s29, 1
    %s31 = scalar_select %p30, 0, %s29
    %s32 = sadd.s32 1, %s16
    %s33 = scalar_select %p30, %s32, %s16
    %p34 = scmp.ge.s32.totalorder %s33, 2
    %s35 = scalar_select %p34, 0, %s33
    %s36 = ssub.s32 %s16, %s35
    %p37 = scmp.eq.s32.totalorder %s36, 0
    %s39 = sadd.s32 %s38, 1
    %s40 = scalar_select %p37, %s38, %s39
    %p43 = pneg %p37
    %p44 = scmp.eq.s32.totalorder %s9, 1
    %p45 = por %p43, %p44
    %p46 = scmp.ne.s32.totalorder %s38, %s41
    %p47 = scmp.eq.s32.totalorder %s9, 0
    %p48 = por %p46, %p47
    %p49 = scmp.ne.s32.totalorder %s38, %s41
    %p50 = scmp.eq.s32.totalorder %s14, 1
    %p51 = por %p49, %p50
    %p52 = scmp.ne.s32.totalorder %s41, %s42
    %p53 = scmp.eq.s32.totalorder %s14, 0
    %p54 = por %p52, %p53
    %p55 = scmp.ne.s32.totalorder %s41, %s42
    %p56 = scmp.eq.s32.totalorder %s15, 1
    %p57 = por %p55, %p56
    %p59 = scmp.ne.s32.totalorder %s42, %s58
    %p60 = scmp.eq.s32.totalorder %s15, 0
    %p61 = por %p59, %p60
    %s62 = ssub.s32 %s18, %s27
    %p63 = scmp.eq.s32.totalorder %s62, 0
    %s65 = sadd.s32 %s64, 1
    %s66 = scalar_select %p63, %s64, %s65
    %p69 = pneg %p63
    %p70 = scmp.eq.s32.totalorder %s9, 1
    %p71 = por %p69, %p70
    %p72 = scmp.ne.s32.totalorder %s64, %s67
    %p73 = scmp.eq.s32.totalorder %s9, 0
    %p74 = por %p72, %p73
    %p75 = scmp.ne.s32.totalorder %s64, %s67
    %p76 = scmp.eq.s32.totalorder %s14, 1
    %p77 = por %p75, %p76
    %p78 = scmp.ne.s32.totalorder %s67, %s68
    %p79 = scmp.eq.s32.totalorder %s14, 0
    %p80 = por %p78, %p79
    %p81 = scmp.ne.s32.totalorder %s67, %s68
    %p82 = scmp.eq.s32.totalorder %s15, 1
    %p83 = por %p81, %p82
    %p85 = scmp.ne.s32.totalorder %s68, %s84
    %p86 = scmp.eq.s32.totalorder %s15, 0
    %p87 = por %p85, %p86
    %s88 = ssub.s32 %s18, %s27
    %p89 = scmp.eq.s32.totalorder %s88, 0
    %s91 = sadd.s32 %s90, 1
    %s92 = scalar_select %p89, %s90, %s91
    %p95 = pneg %p89
    %p96 = scmp.eq.s32.totalorder %s9, 1
    %p97 = por %p95, %p96
    %p98 = scmp.ne.s32.totalorder %s90, %s93
    %p99 = scmp.eq.s32.totalorder %s9, 0
    %p100 = por %p98, %p99
    %p101 = scmp.ne.s32.totalorder %s90, %s93
    %p102 = scmp.eq.s32.totalorder %s14, 1
    %p103 = por %p101, %p102
    %p104 = scmp.ne.s32.totalorder %s93, %s94
    %p105 = scmp.eq.s32.totalorder %s14, 0
    %p106 = por %p104, %p105
    %p107 = scmp.ne.s32.totalorder %s93, %s94
    %p108 = scmp.eq.s32.totalorder %s15, 1
    %p109 = por %p107, %p108
    %p111 = scmp.ne.s32.totalorder %s94, %s110
    %p112 = scmp.eq.s32.totalorder %s15, 0
    %p113 = por %p111, %p112
    %s114 = ssub.s32 %s16, %s35
    %s115 = ssub.s32 %s17, %s31
    %s116 = sor.u32 %s114, %s115
    %s117 = ssub.s32 %s18, %s27
    %s118 = sor.u32 %s116, %s117
    %p119 = scmp.eq.s32.totalorder %s118, 0
    %s121 = sadd.s32 %s120, 1
    %s122 = scalar_select %p119, %s120, %s121
    %p125 = pneg %p119
    %p126 = scmp.eq.s32.totalorder %s9, 1
    %p127 = por %p125, %p126
    %p128 = scmp.ne.s32.totalorder %s120, %s123
    %p129 = scmp.eq.s32.totalorder %s9, 0
    %p130 = por %p128, %p129
    %p131 = scmp.ne.s32.totalorder %s120, %s123
    %p132 = scmp.eq.s32.totalorder %s14, 1
    %p133 = por %p131, %p132
    %p134 = scmp.ne.s32.totalorder %s123, %s124
    %p135 = scmp.eq.s32.totalorder %s14, 0
    %p136 = por %p134, %p135
    %p137 = scmp.ne.s32.totalorder %s123, %s124
    %p138 = scmp.eq.s32.totalorder %s15, 1
    %p139 = por %p137, %p138
    %p141 = scmp.ne.s32.totalorder %s124, %s140
    %p142 = scmp.eq.s32.totalorder %s15, 0
    %p143 = por %p141, %p142
    %p144 = scmp.le.s32.totalorder 1, %s9
    %p145 = scmp.lt.s32.totalorder %s9, 3
    %p146 = pnand %p144, %p145
    %p147 = pneg %p146
    // Predicated region
    $region9: #{tpu_custom_call.1} parent=5 // pred_check
      _
    $region10: #{tpu_custom_call.1} parent=5 // pred_check_branch
      %149 = sbr.rel (%p146) target = $region12
    $region11: #{tpu_custom_call.1} parent=5 // pred_region
      %s150 = ssub.s32 %s9, 1
      // Predicated region
      $region13: #{tpu_custom_call.1} parent=11 // pred_check
        %p151 = pneg %p80
      $region14: #{tpu_custom_call.1} parent=11 // pred_check_branch
        %153 = sbr.rel (%p151) target = $region16
      $region15: #{tpu_custom_call.1} parent=11 // pred_region
        %p154 = scmp.lt.s32.totalorder %s21, 0
        %s155 = scalar_select %p154, %s21, 0
        %s156 = smul.addr %s155, 8
        %s157 = scalar_lea.vmem %s1, %s156
      $region16: #{tpu_custom_call.1} parent=11 // pred_fallthru
        _
      // Predicated region
      $region17: #{tpu_custom_call.1} parent=11 // pred_check
        %p158 = pneg %p106
      $region18: #{tpu_custom_call.1} parent=11 // pred_check_branch
        %160 = sbr.rel (%p158) target = $region20
      $region19: #{tpu_custom_call.1} parent=11 // pred_region
        %p161 = scmp.lt.s32.totalorder %s21, 0
        %s162 = scalar_select %p161, %s21, 0
        %s163 = scalar_lea.vmem %s2, %s162
      $region20: #{tpu_custom_call.1} parent=11 // pred_fallthru
        _
    $region12: #{tpu_custom_call.1} parent=5 // pred_fallthru
      _
    %p164 = scmp.lt.s32.totalorder %s9, 2
    // Predicated region
    $region21: #{tpu_custom_call.1} parent=5 // pred_check
      %p165 = pneg %p164
    $region22: #{tpu_custom_call.1} parent=5 // pred_check_branch
      %167 = sbr.rel (%p165) target = $region24
    $region23: #{tpu_custom_call.1} parent=5 // pred_region
      // Predicated region
      $region25: #{tpu_custom_call.1} parent=23 // pred_check
        %p168 = pneg %p48
      $region26: #{tpu_custom_call.1} parent=23 // pred_check_branch
        %170 = sbr.rel (%p168) target = $region28
      $region27: #{tpu_custom_call.1} parent=23 // pred_region
        %p171 = scmp.lt.s32.totalorder %s16, 1
        %s172 = scalar_select %p171, %s16, 1
        %s173 = smul.addr %s172, 54
        %s174 = smul.addr %s173, 8
        %s175 = scalar_lea.vmem %s0, %s174
      $region28: #{tpu_custom_call.1} parent=23 // pred_fallthru
        _
    $region24: #{tpu_custom_call.1} parent=5 // pred_fallthru
      _
    %p176 = scmp.le.s32.totalorder 1, %s9
    %p177 = scmp.lt.s32.totalorder %s9, 3
    %p178 = pnand %p176, %p177
    %p179 = pneg %p178
    // Predicated region
    $region29: #{tpu_custom_call.1} parent=5 // pred_check
      _
    $region30: #{tpu_custom_call.1} parent=5 // pred_check_branch
      %181 = sbr.rel (%p178) target = $region32
    $region31: #{tpu_custom_call.1} parent=5 // pred_region
      %s182 = ssub.s32 %s9, 1
      %p183 = scmp.lt.s32.totalorder %s19, 1
      %s184 = scalar_select %p183, %s19, 1
      %s185 = smul.addr %s184, 54
      %s186 = smul.addr %s185, 8
      %s187 = scalar_lea.vmem %s0, %s186
      %p188 = pneg %p54
      %p189 = pneg %p51
      %p190 = scmp.lt.s32.totalorder %s21, 0
      %s191 = scalar_select %p190, %s21, 0
      %s192 = smul.addr %s191, 8
      %s193 = scalar_lea.vmem %s1, %s192
      %p194 = pneg %p80
      %p195 = pneg %p77
      %p196 = scmp.lt.s32.totalorder %s21, 0
      %s197 = scalar_select %p196, %s21, 0
      %s198 = scalar_lea.vmem %s2, %s197
      %p199 = pneg %p106
      %p200 = pneg %p103
      %p201 = pneg %p136
      %p202 = pneg %p133
      %s203 = smul.u32 32, %s20
      %p204 = scmp.lt.s32.totalorder %s19, 1
      %s205 = scalar_select %p204, %s19, 1
      %p206 = scmp.lt.s32.totalorder %s203, 31
      %s207 = scalar_select %p206, %s203, 31
      %p208 = scmp.lt.s32.totalorder %s21, 0
      %s209 = scalar_select %p208, %s21, 0
      %s210 = sadd.s32 %s209, %s207
      %s211 = smul.addr %s205, 32
      %s212 = sadd.s32 %s210, %s211
      %s213 = smul.addr %s212, 8
      %s214 = scalar_lea.vmem %s3, %s213
      %p215 = scmp.lt.s32.totalorder %s19, 1
      %s216 = scalar_select %p215, %s19, 1
      %s217 = smul.addr %s216, 54
      %s218 = smul.addr %s217, 8
      %s219 = scalar_lea.vmem %s0, %s218
      %p220 = scmp.lt.s32.totalorder %s21, 0
      %s221 = scalar_select %p220, %s21, 0
      %s222 = smul.addr %s221, 8
      %s223 = scalar_lea.vmem %s1, %s222
      %p224 = scmp.lt.s32.totalorder %s21, 0
      %s225 = scalar_select %p224, %s21, 0
      %s226 = scalar_lea.vmem %s2, %s225
      %s227 = smul.u32 32, %s20
      %p228 = scmp.lt.s32.totalorder %s19, 1
      %s229 = scalar_select %p228, %s19, 1
      %p230 = scmp.lt.s32.totalorder %s227, 31
      %s231 = scalar_select %p230, %s227, 31
      %p232 = scmp.lt.s32.totalorder %s21, 0
      %s233 = scalar_select %p232, %s21, 0
      %s234 = sadd.s32 %s233, %s231
      %s235 = smul.addr %s229, 32
      %s236 = sadd.s32 %s234, %s235
      %s237 = smul.addr %s236, 8
      %s238 = scalar_lea.vmem %s3, %s237
      %s239 = smul.u32 32, %s20
      %p240 = scmp.eq.s32.totalorder %s21, 0
      // Predicated region
      $region33: #{tpu_custom_call.1} parent=31 // pred_check
        %p241 = pneg %p240
      $region34: #{tpu_custom_call.1} parent=31 // pred_check_branch
        %243 = sbr.rel (%p241) target = $region36
      $region35: #{tpu_custom_call.1} parent=31 // pred_region
        %vm244 = vcmask 1047840
        %245 = vst.msk [vmem:[#allocation2] sm:$0xff] %vm244, 0.0
        %246 = vst.msk [vmem:[#allocation2 + $0x8] sm:$0xff] %vm244, 0.0
        %247 = vst.msk [vmem:[#allocation2 + $0x10] sm:$0xff] %vm244, 0.0
        %248 = vst.msk [vmem:[#allocation2 + $0x18] sm:$0xff] %vm244, 0.0
        %249 = vst.msk [vmem:[#allocation2 + $0x20] sm:$0xff] %vm244, 0.0
        %250 = vst.msk [vmem:[#allocation2 + $0x28] sm:$0xff] %vm244, 0.0
        %251 = vst.msk [vmem:[#allocation2 + $0x30] sm:$0xff] %vm244, 0.0
        %252 = vst.msk [vmem:[#allocation2 + $0x38] sm:$0xff] %vm244, 0.0
        %253 = vst.msk [vmem:[#allocation2 + $0x40] sm:$0xff] %vm244, 0.0
        %254 = vst.msk [vmem:[#allocation2 + $0x48] sm:$0xff] %vm244, 0.0
        %255 = vst.msk [vmem:[#allocation2 + $0x50] sm:$0xff] %vm244, 0.0
        %256 = vst.msk [vmem:[#allocation2 + $0x58] sm:$0xff] %vm244, 0.0
        %257 = vst.msk [vmem:[#allocation2 + $0x60] sm:$0xff] %vm244, 0.0
        %258 = vst.msk [vmem:[#allocation2 + $0x68] sm:$0xff] %vm244, 0.0
        %259 = vst.msk [vmem:[#allocation2 + $0x70] sm:$0xff] %vm244, 0.0
        %260 = vst.msk [vmem:[#allocation2 + $0x78] sm:$0xff] %vm244, 0.0
        %261 = vst.msk [vmem:[#allocation2 + $0x80] sm:$0xff] %vm244, 0.0
        %262 = vst.msk [vmem:[#allocation2 + $0x88] sm:$0xff] %vm244, 0.0
        %263 = vst.msk [vmem:[#allocation2 + $0x90] sm:$0xff] %vm244, 0.0
        %264 = vst.msk [vmem:[#allocation2 + $0x98] sm:$0xff] %vm244, 0.0
        %265 = vst.msk [vmem:[#allocation2 + $0xa0] sm:$0xff] %vm244, 0.0
        %266 = vst.msk [vmem:[#allocation2 + $0xa8] sm:$0xff] %vm244, 0.0
        %267 = vst.msk [vmem:[#allocation2 + $0xb0] sm:$0xff] %vm244, 0.0
        %268 = vst.msk [vmem:[#allocation2 + $0xb8] sm:$0xff] %vm244, 0.0
        %269 = vst.msk [vmem:[#allocation2 + $0xc0] sm:$0xff] %vm244, 0.0
        %270 = vst.msk [vmem:[#allocation2 + $0xc8] sm:$0xff] %vm244, 0.0
        %271 = vst.msk [vmem:[#allocation2 + $0xd0] sm:$0xff] %vm244, 0.0
        %272 = vst.msk [vmem:[#allocation2 + $0xd8] sm:$0xff] %vm244, 0.0
        %273 = vst.msk [vmem:[#allocation2 + $0xe0] sm:$0xff] %vm244, 0.0
        %274 = vst.msk [vmem:[#allocation2 + $0xe8] sm:$0xff] %vm244, 0.0
        %275 = vst.msk [vmem:[#allocation2 + $0xf0] sm:$0xff] %vm244, 0.0
        %276 = vst.msk [vmem:[#allocation2 + $0xf8] sm:$0xff] %vm244, 0.0
        %s277 = smul.u32 %s20, 16
        %s278 = smul.u32 %s277, 24
        %s279 = scalar_lea.vmem %s219, %s278
        %v280 = vld [vmem:[%s279] sm:$0xff]
        %v281 = vld [vmem:[%s279 + $0x8] sm:$0xff]
        %v282 = vld [vmem:[%s279 + $0x18] sm:$0xff]
        %v283 = vld [vmem:[%s279 + $0x20] sm:$0xff]
        %v284 = vld [vmem:[%s279 + $0x30] sm:$0xff]
        %v285 = vld [vmem:[%s279 + $0x38] sm:$0xff]
        %v286 = vld [vmem:[%s279 + $0x48] sm:$0xff]
        %v287 = vld [vmem:[%s279 + $0x50] sm:$0xff]
        %v288 = vld [vmem:[%s279 + $0x60] sm:$0xff]
        %v289 = vld [vmem:[%s279 + $0x68] sm:$0xff]
        %v290 = vld [vmem:[%s279 + $0x78] sm:$0xff]
        %v291 = vld [vmem:[%s279 + $0x80] sm:$0xff]
        %v292 = vld [vmem:[%s279 + $0x90] sm:$0xff]
        %v293 = vld [vmem:[%s279 + $0x98] sm:$0xff]
        %v294 = vld [vmem:[%s279 + $0xa8] sm:$0xff]
        %v295 = vld [vmem:[%s279 + $0xb0] sm:$0xff]
        %v296 = vld [vmem:[%s279 + $0xc0] sm:$0xff]
        %v297 = vld [vmem:[%s279 + $0xc8] sm:$0xff]
        %v298 = vld [vmem:[%s279 + $0xd8] sm:$0xff]
        %v299 = vld [vmem:[%s279 + $0xe0] sm:$0xff]
        %v300 = vld [vmem:[%s279 + $0xf0] sm:$0xff]
        %v301 = vld [vmem:[%s279 + $0xf8] sm:$0xff]
        %v302 = vld [vmem:[%s279 + $0x108] sm:$0xff]
        %v303 = vld [vmem:[%s279 + $0x110] sm:$0xff]
        %v304 = vld [vmem:[%s279 + $0x120] sm:$0xff]
        %v305 = vld [vmem:[%s279 + $0x128] sm:$0xff]
        %v306 = vld [vmem:[%s279 + $0x138] sm:$0xff]
        %v307 = vld [vmem:[%s279 + $0x140] sm:$0xff]
        %v308 = vld [vmem:[%s279 + $0x150] sm:$0xff]
        %v309 = vld [vmem:[%s279 + $0x158] sm:$0xff]
        %v310 = vld [vmem:[%s279 + $0x168] sm:$0xff]
        %v311 = vld [vmem:[%s279 + $0x170] sm:$0xff]
        %vm312 = vcmask 31744
        %313 = vst.msk [vmem:[#allocation2] sm:$0xff] %vm312, %v280
        %314 = vst.msk [vmem:[#allocation2 + $0x8] sm:$0xff] %vm312, %v281
        %315 = vst.msk [vmem:[#allocation2 + $0x10] sm:$0xff] %vm312, %v282
        %316 = vst.msk [vmem:[#allocation2 + $0x18] sm:$0xff] %vm312, %v283
        %317 = vst.msk [vmem:[#allocation2 + $0x20] sm:$0xff] %vm312, %v284
        %318 = vst.msk [vmem:[#allocation2 + $0x28] sm:$0xff] %vm312, %v285
        %319 = vst.msk [vmem:[#allocation2 + $0x30] sm:$0xff] %vm312, %v286
        %320 = vst.msk [vmem:[#allocation2 + $0x38] sm:$0xff] %vm312, %v287
        %321 = vst.msk [vmem:[#allocation2 + $0x40] sm:$0xff] %vm312, %v288
        %322 = vst.msk [vmem:[#allocation2 + $0x48] sm:$0xff] %vm312, %v289
        %323 = vst.msk [vmem:[#allocation2 + $0x50] sm:$0xff] %vm312, %v290
        %324 = vst.msk [vmem:[#allocation2 + $0x58] sm:$0xff] %vm312, %v291
        %325 = vst.msk [vmem:[#allocation2 + $0x60] sm:$0xff] %vm312, %v292
        %326 = vst.msk [vmem:[#allocation2 + $0x68] sm:$0xff] %vm312, %v293
        %327 = vst.msk [vmem:[#allocation2 + $0x70] sm:$0xff] %vm312, %v294
        %328 = vst.msk [vmem:[#allocation2 + $0x78] sm:$0xff] %vm312, %v295
        %329 = vst.msk [vmem:[#allocation2 + $0x80] sm:$0xff] %vm312, %v296
        %330 = vst.msk [vmem:[#allocation2 + $0x88] sm:$0xff] %vm312, %v297
        %331 = vst.msk [vmem:[#allocation2 + $0x90] sm:$0xff] %vm312, %v298
        %332 = vst.msk [vmem:[#allocation2 + $0x98] sm:$0xff] %vm312, %v299
        %333 = vst.msk [vmem:[#allocation2 + $0xa0] sm:$0xff] %vm312, %v300
        %334 = vst.msk [vmem:[#allocation2 + $0xa8] sm:$0xff] %vm312, %v301
        %335 = vst.msk [vmem:[#allocation2 + $0xb0] sm:$0xff] %vm312, %v302
        %336 = vst.msk [vmem:[#allocation2 + $0xb8] sm:$0xff] %vm312, %v303
        %337 = vst.msk [vmem:[#allocation2 + $0xc0] sm:$0xff] %vm312, %v304
        %338 = vst.msk [vmem:[#allocation2 + $0xc8] sm:$0xff] %vm312, %v305
        %339 = vst.msk [vmem:[#allocation2 + $0xd0] sm:$0xff] %vm312, %v306
        %340 = vst.msk [vmem:[#allocation2 + $0xd8] sm:$0xff] %vm312, %v307
        %341 = vst.msk [vmem:[#allocation2 + $0xe0] sm:$0xff] %vm312, %v308
        %342 = vst.msk [vmem:[#allocation2 + $0xe8] sm:$0xff] %vm312, %v309
        %343 = vst.msk [vmem:[#allocation2 + $0xf0] sm:$0xff] %vm312, %v310
        %344 = vst.msk [vmem:[#allocation2 + $0xf8] sm:$0xff] %vm312, %v311
        %v345 = vld [vmem:[%s279 + $0x1] sm:$0xff]
        %v346 = vld [vmem:[%s279 + $0x9] sm:$0xff]
        %v347 = vld [vmem:[%s279 + $0x19] sm:$0xff]
        %v348 = vld [vmem:[%s279 + $0x21] sm:$0xff]
        %v349 = vld [vmem:[%s279 + $0x31] sm:$0xff]
        %v350 = vld [vmem:[%s279 + $0x39] sm:$0xff]
        %v351 = vld [vmem:[%s279 + $0x49] sm:$0xff]
        %v352 = vld [vmem:[%s279 + $0x51] sm:$0xff]
        %v353 = vld [vmem:[%s279 + $0x61] sm:$0xff]
        %v354 = vld [vmem:[%s279 + $0x69] sm:$0xff]
        %v355 = vld [vmem:[%s279 + $0x79] sm:$0xff]
        %v356 = vld [vmem:[%s279 + $0x81] sm:$0xff]
        %v357 = vld [vmem:[%s279 + $0x91] sm:$0xff]
        %v358 = vld [vmem:[%s279 + $0x99] sm:$0xff]
        %v359 = vld [vmem:[%s279 + $0xa9] sm:$0xff]
        %v360 = vld [vmem:[%s279 + $0xb1] sm:$0xff]
        %v361 = vld [vmem:[%s279 + $0xc1] sm:$0xff]
        %v362 = vld [vmem:[%s279 + $0xc9] sm:$0xff]
        %v363 = vld [vmem:[%s279 + $0xd9] sm:$0xff]
        %v364 = vld [vmem:[%s279 + $0xe1] sm:$0xff]
        %v365 = vld [vmem:[%s279 + $0xf1] sm:$0xff]
        %v366 = vld [vmem:[%s279 + $0xf9] sm:$0xff]
        %v367 = vld [vmem:[%s279 + $0x109] sm:$0xff]
        %v368 = vld [vmem:[%s279 + $0x111] sm:$0xff]
        %v369 = vld [vmem:[%s279 + $0x121] sm:$0xff]
        %v370 = vld [vmem:[%s279 + $0x129] sm:$0xff]
        %v371 = vld [vmem:[%s279 + $0x139] sm:$0xff]
        %v372 = vld [vmem:[%s279 + $0x141] sm:$0xff]
        %v373 = vld [vmem:[%s279 + $0x151] sm:$0xff]
        %v374 = vld [vmem:[%s279 + $0x159] sm:$0xff]
        %v375 = vld [vmem:[%s279 + $0x169] sm:$0xff]
        %v376 = vld [vmem:[%s279 + $0x171] sm:$0xff]
        %409 = vrot.lane.b32.xlu0 %v345, 4
        %v410 = vpop.permute.xlu0 %409
        %411 = vrot.lane.b32.xlu0 %v346, 4
        %v412 = vpop.permute.xlu0 %411
        %413 = vrot.lane.b32.xlu0 %v347, 4
        %v414 = vpop.permute.xlu0 %413
        %415 = vrot.lane.b32.xlu0 %v348, 4
        %v416 = vpop.permute.xlu0 %415
        %417 = vrot.lane.b32.xlu0 %v349, 4
        %v418 = vpop.permute.xlu0 %417
        %419 = vrot.lane.b32.xlu0 %v350, 4
        %v420 = vpop.permute.xlu0 %419
        %421 = vrot.lane.b32.xlu0 %v351, 4
        %v422 = vpop.permute.xlu0 %421
        %423 = vrot.lane.b32.xlu0 %v352, 4
        %v424 = vpop.permute.xlu0 %423
        %425 = vrot.lane.b32.xlu0 %v353, 4
        %v426 = vpop.permute.xlu0 %425
        %427 = vrot.lane.b32.xlu0 %v354, 4
        %v428 = vpop.permute.xlu0 %427
        %429 = vrot.lane.b32.xlu0 %v355, 4
        %v430 = vpop.permute.xlu0 %429
        %431 = vrot.lane.b32.xlu0 %v356, 4
        %v432 = vpop.permute.xlu0 %431
        %433 = vrot.lane.b32.xlu0 %v357, 4
        %v434 = vpop.permute.xlu0 %433
        %435 = vrot.lane.b32.xlu0 %v358, 4
        %v436 = vpop.permute.xlu0 %435
        %437 = vrot.lane.b32.xlu0 %v359, 4
        %v438 = vpop.permute.xlu0 %437
        %439 = vrot.lane.b32.xlu0 %v360, 4
        %v440 = vpop.permute.xlu0 %439
        %441 = vrot.lane.b32.xlu0 %v361, 4
        %v442 = vpop.permute.xlu0 %441
        %443 = vrot.lane.b32.xlu0 %v362, 4
        %v444 = vpop.permute.xlu0 %443
        %445 = vrot.lane.b32.xlu0 %v363, 4
        %v446 = vpop.permute.xlu0 %445
        %447 = vrot.lane.b32.xlu0 %v364, 4
        %v448 = vpop.permute.xlu0 %447
        %449 = vrot.lane.b32.xlu0 %v365, 4
        %v450 = vpop.permute.xlu0 %449
        %451 = vrot.lane.b32.xlu0 %v366, 4
        %v452 = vpop.permute.xlu0 %451
        %453 = vrot.lane.b32.xlu0 %v367, 4
        %v454 = vpop.permute.xlu0 %453
        %455 = vrot.lane.b32.xlu0 %v368, 4
        %v456 = vpop.permute.xlu0 %455
        %457 = vrot.lane.b32.xlu0 %v369, 4
        %v458 = vpop.permute.xlu0 %457
        %459 = vrot.lane.b32.xlu0 %v370, 4
        %v460 = vpop.permute.xlu0 %459
        %461 = vrot.lane.b32.xlu0 %v371, 4
        %v462 = vpop.permute.xlu0 %461
        %463 = vrot.lane.b32.xlu0 %v372, 4
        %v464 = vpop.permute.xlu0 %463
        %465 = vrot.lane.b32.xlu0 %v373, 4
        %v466 = vpop.permute.xlu0 %465
        %467 = vrot.lane.b32.xlu0 %v374, 4
        %v468 = vpop.permute.xlu0 %467
        %469 = vrot.lane.b32.xlu0 %v375, 4
        %v470 = vpop.permute.xlu0 %469
        %471 = vrot.lane.b32.xlu0 %v376, 4
        %v472 = vpop.permute.xlu0 %471
        %vm505 = vcmask 64544
        %506 = vst.msk [vmem:[#allocation2] sm:$0xff] %vm505, %v410
        %507 = vst.msk [vmem:[#allocation2 + $0x8] sm:$0xff] %vm505, %v412
        %508 = vst.msk [vmem:[#allocation2 + $0x10] sm:$0xff] %vm505, %v414
        %509 = vst.msk [vmem:[#allocation2 + $0x18] sm:$0xff] %vm505, %v416
        %510 = vst.msk [vmem:[#allocation2 + $0x20] sm:$0xff] %vm505, %v418
        %511 = vst.msk [vmem:[#allocation2 + $0x28] sm:$0xff] %vm505, %v420
        %512 = vst.msk [vmem:[#allocation2 + $0x30] sm:$0xff] %vm505, %v422
        %513 = vst.msk [vmem:[#allocation2 + $0x38] sm:$0xff] %vm505, %v424
        %514 = vst.msk [vmem:[#allocation2 + $0x40] sm:$0xff] %vm505, %v426
        %515 = vst.msk [vmem:[#allocation2 + $0x48] sm:$0xff] %vm505, %v428
        %516 = vst.msk [vmem:[#allocation2 + $0x50] sm:$0xff] %vm505, %v430
        %517 = vst.msk [vmem:[#allocation2 + $0x58] sm:$0xff] %vm505, %v432
        %518 = vst.msk [vmem:[#allocation2 + $0x60] sm:$0xff] %vm505, %v434
        %519 = vst.msk [vmem:[#allocation2 + $0x68] sm:$0xff] %vm505, %v436
        %520 = vst.msk [vmem:[#allocation2 + $0x70] sm:$0xff] %vm505, %v438
        %521 = vst.msk [vmem:[#allocation2 + $0x78] sm:$0xff] %vm505, %v440
        %522 = vst.msk [vmem:[#allocation2 + $0x80] sm:$0xff] %vm505, %v442
        %523 = vst.msk [vmem:[#allocation2 + $0x88] sm:$0xff] %vm505, %v444
        %524 = vst.msk [vmem:[#allocation2 + $0x90] sm:$0xff] %vm505, %v446
        %525 = vst.msk [vmem:[#allocation2 + $0x98] sm:$0xff] %vm505, %v448
        %526 = vst.msk [vmem:[#allocation2 + $0xa0] sm:$0xff] %vm505, %v450
        %527 = vst.msk [vmem:[#allocation2 + $0xa8] sm:$0xff] %vm505, %v452
        %528 = vst.msk [vmem:[#allocation2 + $0xb0] sm:$0xff] %vm505, %v454
        %529 = vst.msk [vmem:[#allocation2 + $0xb8] sm:$0xff] %vm505, %v456
        %530 = vst.msk [vmem:[#allocation2 + $0xc0] sm:$0xff] %vm505, %v458
        %531 = vst.msk [vmem:[#allocation2 + $0xc8] sm:$0xff] %vm505, %v460
        %532 = vst.msk [vmem:[#allocation2 + $0xd0] sm:$0xff] %vm505, %v462
        %533 = vst.msk [vmem:[#allocation2 + $0xd8] sm:$0xff] %vm505, %v464
        %534 = vst.msk [vmem:[#allocation2 + $0xe0] sm:$0xff] %vm505, %v466
        %535 = vst.msk [vmem:[#allocation2 + $0xe8] sm:$0xff] %vm505, %v468
        %536 = vst.msk [vmem:[#allocation2 + $0xf0] sm:$0xff] %vm505, %v470
        %537 = vst.msk [vmem:[#allocation2 + $0xf8] sm:$0xff] %vm505, %v472
        %v538 = vld [vmem:[%s279 + $0x2] sm:$0xff]
        %v539 = vld [vmem:[%s279 + $0xa] sm:$0xff]
        %v540 = vld [vmem:[%s279 + $0x1a] sm:$0xff]
        %v541 = vld [vmem:[%s279 + $0x22] sm:$0xff]
        %v542 = vld [vmem:[%s279 + $0x32] sm:$0xff]
        %v543 = vld [vmem:[%s279 + $0x3a] sm:$0xff]
        %v544 = vld [vmem:[%s279 + $0x4a] sm:$0xff]
        %v545 = vld [vmem:[%s279 + $0x52] sm:$0xff]
        %v546 = vld [vmem:[%s279 + $0x62] sm:$0xff]
        %v547 = vld [vmem:[%s279 + $0x6a] sm:$0xff]
        %v548 = vld [vmem:[%s279 + $0x7a] sm:$0xff]
        %v549 = vld [vmem:[%s279 + $0x82] sm:$0xff]
        %v550 = vld [vmem:[%s279 + $0x92] sm:$0xff]
        %v551 = vld [vmem:[%s279 + $0x9a] sm:$0xff]
        %v552 = vld [vmem:[%s279 + $0xaa] sm:$0xff]
        %v553 = vld [vmem:[%s279 + $0xb2] sm:$0xff]
        %v554 = vld [vmem:[%s279 + $0xc2] sm:$0xff]
        %v555 = vld [vmem:[%s279 + $0xca] sm:$0xff]
        %v556 = vld [vmem:[%s279 + $0xda] sm:$0xff]
        %v557 = vld [vmem:[%s279 + $0xe2] sm:$0xff]
        %v558 = vld [vmem:[%s279 + $0xf2] sm:$0xff]
        %v559 = vld [vmem:[%s279 + $0xfa] sm:$0xff]
        %v560 = vld [vmem:[%s279 + $0x10a] sm:$0xff]
        %v561 = vld [vmem:[%s279 + $0x112] sm:$0xff]
        %v562 = vld [vmem:[%s279 + $0x122] sm:$0xff]
        %v563 = vld [vmem:[%s279 + $0x12a] sm:$0xff]
        %v564 = vld [vmem:[%s279 + $0x13a] sm:$0xff]
        %v565 = vld [vmem:[%s279 + $0x142] sm:$0xff]
        %v566 = vld [vmem:[%s279 + $0x152] sm:$0xff]
        %v567 = vld [vmem:[%s279 + $0x15a] sm:$0xff]
        %v568 = vld [vmem:[%s279 + $0x16a] sm:$0xff]
        %v569 = vld [vmem:[%s279 + $0x172] sm:$0xff]
        %602 = vrot.lane.b32.xlu0 %v538, 8
        %v603 = vpop.permute.xlu0 %602
        %604 = vrot.lane.b32.xlu0 %v539, 8
        %v605 = vpop.permute.xlu0 %604
        %606 = vrot.lane.b32.xlu0 %v540, 8
        %v607 = vpop.permute.xlu0 %606
        %608 = vrot.lane.b32.xlu0 %v541, 8
        %v609 = vpop.permute.xlu0 %608
        %610 = vrot.lane.b32.xlu0 %v542, 8
        %v611 = vpop.permute.xlu0 %610
        %612 = vrot.lane.b32.xlu0 %v543, 8
        %v613 = vpop.permute.xlu0 %612
        %614 = vrot.lane.b32.xlu0 %v544, 8
        %v615 = vpop.permute.xlu0 %614
        %616 = vrot.lane.b32.xlu0 %v545, 8
        %v617 = vpop.permute.xlu0 %616
        %618 = vrot.lane.b32.xlu0 %v546, 8
        %v619 = vpop.permute.xlu0 %618
        %620 = vrot.lane.b32.xlu0 %v547, 8
        %v621 = vpop.permute.xlu0 %620
        %622 = vrot.lane.b32.xlu0 %v548, 8
        %v623 = vpop.permute.xlu0 %622
        %624 = vrot.lane.b32.xlu0 %v549, 8
        %v625 = vpop.permute.xlu0 %624
        %626 = vrot.lane.b32.xlu0 %v550, 8
        %v627 = vpop.permute.xlu0 %626
        %628 = vrot.lane.b32.xlu0 %v551, 8
        %v629 = vpop.permute.xlu0 %628
        %630 = vrot.lane.b32.xlu0 %v552, 8
        %v631 = vpop.permute.xlu0 %630
        %632 = vrot.lane.b32.xlu0 %v553, 8
        %v633 = vpop.permute.xlu0 %632
        %634 = vrot.lane.b32.xlu0 %v554, 8
        %v635 = vpop.permute.xlu0 %634
        %636 = vrot.lane.b32.xlu0 %v555, 8
        %v637 = vpop.permute.xlu0 %636
        %638 = vrot.lane.b32.xlu0 %v556, 8
        %v639 = vpop.permute.xlu0 %638
        %640 = vrot.lane.b32.xlu0 %v557, 8
        %v641 = vpop.permute.xlu0 %640
        %642 = vrot.lane.b32.xlu0 %v558, 8
        %v643 = vpop.permute.xlu0 %642
        %644 = vrot.lane.b32.xlu0 %v559, 8
        %v645 = vpop.permute.xlu0 %644
        %646 = vrot.lane.b32.xlu0 %v560, 8
        %v647 = vpop.permute.xlu0 %646
        %648 = vrot.lane.b32.xlu0 %v561, 8
        %v649 = vpop.permute.xlu0 %648
        %650 = vrot.lane.b32.xlu0 %v562, 8
        %v651 = vpop.permute.xlu0 %650
        %652 = vrot.lane.b32.xlu0 %v563, 8
        %v653 = vpop.permute.xlu0 %652
        %654 = vrot.lane.b32.xlu0 %v564, 8
        %v655 = vpop.permute.xlu0 %654
        %656 = vrot.lane.b32.xlu0 %v565, 8
        %v657 = vpop.permute.xlu0 %656
        %658 = vrot.lane.b32.xlu0 %v566, 8
        %v659 = vpop.permute.xlu0 %658
        %660 = vrot.lane.b32.xlu0 %v567, 8
        %v661 = vpop.permute.xlu0 %660
        %662 = vrot.lane.b32.xlu0 %v568, 8
        %v663 = vpop.permute.xlu0 %662
        %664 = vrot.lane.b32.xlu0 %v569, 8
        %v665 = vpop.permute.xlu0 %664
        %vm698 = vcmask 97344
        %699 = vst.msk [vmem:[#allocation2] sm:$0xff] %vm698, %v603
        %700 = vst.msk [vmem:[#allocation2 + $0x8] sm:$0xff] %vm698, %v605
        %701 = vst.msk [vmem:[#allocation2 + $0x10] sm:$0xff] %vm698, %v607
        %702 = vst.msk [vmem:[#allocation2 + $0x18] sm:$0xff] %vm698, %v609
        %703 = vst.msk [vmem:[#allocation2 + $0x20] sm:$0xff] %vm698, %v611
        %704 = vst.msk [vmem:[#allocation2 + $0x28] sm:$0xff] %vm698, %v613
        %705 = vst.msk [vmem:[#allocation2 + $0x30] sm:$0xff] %vm698, %v615
        %706 = vst.msk [vmem:[#allocation2 + $0x38] sm:$0xff] %vm698, %v617
        %707 = vst.msk [vmem:[#allocation2 + $0x40] sm:$0xff] %vm698, %v619
        %708 = vst.msk [vmem:[#allocation2 + $0x48] sm:$0xff] %vm698, %v621
        %709 = vst.msk [vmem:[#allocation2 + $0x50] sm:$0xff] %vm698, %v623
        %710 = vst.msk [vmem:[#allocation2 + $0x58] sm:$0xff] %vm698, %v625
        %711 = vst.msk [vmem:[#allocation2 + $0x60] sm:$0xff] %vm698, %v627
        %712 = vst.msk [vmem:[#allocation2 + $0x68] sm:$0xff] %vm698, %v629
        %713 = vst.msk [vmem:[#allocation2 + $0x70] sm:$0xff] %vm698, %v631
        %714 = vst.msk [vmem:[#allocation2 + $0x78] sm:$0xff] %vm698, %v633
        %715 = vst.msk [vmem:[#allocation2 + $0x80] sm:$0xff] %vm698, %v635
        %716 = vst.msk [vmem:[#allocation2 + $0x88] sm:$0xff] %vm698, %v637
        %717 = vst.msk [vmem:[#allocation2 + $0x90] sm:$0xff] %vm698, %v639
        %718 = vst.msk [vmem:[#allocation2 + $0x98] sm:$0xff] %vm698, %v641
        %719 = vst.msk [vmem:[#allocation2 + $0xa0] sm:$0xff] %vm698, %v643
        %720 = vst.msk [vmem:[#allocation2 + $0xa8] sm:$0xff] %vm698, %v645
        %721 = vst.msk [vmem:[#allocation2 + $0xb0] sm:$0xff] %vm698, %v647
        %722 = vst.msk [vmem:[#allocation2 + $0xb8] sm:$0xff] %vm698, %v649
        %723 = vst.msk [vmem:[#allocation2 + $0xc0] sm:$0xff] %vm698, %v651
        %724 = vst.msk [vmem:[#allocation2 + $0xc8] sm:$0xff] %vm698, %v653
        %725 = vst.msk [vmem:[#allocation2 + $0xd0] sm:$0xff] %vm698, %v655
        %726 = vst.msk [vmem:[#allocation2 + $0xd8] sm:$0xff] %vm698, %v657
        %727 = vst.msk [vmem:[#allocation2 + $0xe0] sm:$0xff] %vm698, %v659
        %728 = vst.msk [vmem:[#allocation2 + $0xe8] sm:$0xff] %vm698, %v661
        %729 = vst.msk [vmem:[#allocation2 + $0xf0] sm:$0xff] %vm698, %v663
        %730 = vst.msk [vmem:[#allocation2 + $0xf8] sm:$0xff] %vm698, %v665
        %s731 = sadd.s32 %s277, 1
        %s732 = smul.u32 %s731, 24
        %s733 = scalar_lea.vmem %s219, %s732
        %v734 = vld [vmem:[%s733] sm:$0xff]
        %v735 = vld [vmem:[%s733 + $0x8] sm:$0xff]
        %v736 = vld [vmem:[%s733 + $0x18] sm:$0xff]
        %v737 = vld [vmem:[%s733 + $0x20] sm:$0xff]
        %v738 = vld [vmem:[%s733 + $0x30] sm:$0xff]
        %v739 = vld [vmem:[%s733 + $0x38] sm:$0xff]
        %v740 = vld [vmem:[%s733 + $0x48] sm:$0xff]
        %v741 = vld [vmem:[%s733 + $0x50] sm:$0xff]
        %v742 = vld [vmem:[%s733 + $0x60] sm:$0xff]
        %v743 = vld [vmem:[%s733 + $0x68] sm:$0xff]
        %v744 = vld [vmem:[%s733 + $0x78] sm:$0xff]
        %v745 = vld [vmem:[%s733 + $0x80] sm:$0xff]
        %v746 = vld [vmem:[%s733 + $0x90] sm:$0xff]
        %v747 = vld [vmem:[%s733 + $0x98] sm:$0xff]
        %v748 = vld [vmem:[%s733 + $0xa8] sm:$0xff]
        %v749 = vld [vmem:[%s733 + $0xb0] sm:$0xff]
        %v750 = vld [vmem:[%s733 + $0xc0] sm:$0xff]
        %v751 = vld [vmem:[%s733 + $0xc8] sm:$0xff]
        %v752 = vld [vmem:[%s733 + $0xd8] sm:$0xff]
        %v753 = vld [vmem:[%s733 + $0xe0] sm:$0xff]
        %v754 = vld [vmem:[%s733 + $0xf0] sm:$0xff]
        %v755 = vld [vmem:[%s733 + $0xf8] sm:$0xff]
        %v756 = vld [vmem:[%s733 + $0x108] sm:$0xff]
        %v757 = vld [vmem:[%s733 + $0x110] sm:$0xff]
        %v758 = vld [vmem:[%s733 + $0x120] sm:$0xff]
        %v759 = vld [vmem:[%s733 + $0x128] sm:$0xff]
        %v760 = vld [vmem:[%s733 + $0x138] sm:$0xff]
        %v761 = vld [vmem:[%s733 + $0x140] sm:$0xff]
        %v762 = vld [vmem:[%s733 + $0x150] sm:$0xff]
        %v763 = vld [vmem:[%s733 + $0x158] sm:$0xff]
        %v764 = vld [vmem:[%s733 + $0x168] sm:$0xff]
        %v765 = vld [vmem:[%s733 + $0x170] sm:$0xff]
        %798 = vrot.lane.b32.xlu0 %v734, 12
        %v799 = vpop.permute.xlu0 %798
        %800 = vrot.lane.b32.xlu0 %v735, 12
        %v801 = vpop.permute.xlu0 %800
        %802 = vrot.lane.b32.xlu0 %v736, 12
        %v803 = vpop.permute.xlu0 %802
        %804 = vrot.lane.b32.xlu0 %v737, 12
        %v805 = vpop.permute.xlu0 %804
        %806 = vrot.lane.b32.xlu0 %v738, 12
        %v807 = vpop.permute.xlu0 %806
        %808 = vrot.lane.b32.xlu0 %v739, 12
        %v809 = vpop.permute.xlu0 %808
        %810 = vrot.lane.b32.xlu0 %v740, 12
        %v811 = vpop.permute.xlu0 %810
        %812 = vrot.lane.b32.xlu0 %v741, 12
        %v813 = vpop.permute.xlu0 %812
        %814 = vrot.lane.b32.xlu0 %v742, 12
        %v815 = vpop.permute.xlu0 %814
        %816 = vrot.lane.b32.xlu0 %v743, 12
        %v817 = vpop.permute.xlu0 %816
        %818 = vrot.lane.b32.xlu0 %v744, 12
        %v819 = vpop.permute.xlu0 %818
        %820 = vrot.lane.b32.xlu0 %v745, 12
        %v821 = vpop.permute.xlu0 %820
        %822 = vrot.lane.b32.xlu0 %v746, 12
        %v823 = vpop.permute.xlu0 %822
        %824 = vrot.lane.b32.xlu0 %v747, 12
        %v825 = vpop.permute.xlu0 %824
        %826 = vrot.lane.b32.xlu0 %v748, 12
        %v827 = vpop.permute.xlu0 %826
        %828 = vrot.lane.b32.xlu0 %v749, 12
        %v829 = vpop.permute.xlu0 %828
        %830 = vrot.lane.b32.xlu0 %v750, 12
        %v831 = vpop.permute.xlu0 %830
        %832 = vrot.lane.b32.xlu0 %v751, 12
        %v833 = vpop.permute.xlu0 %832
        %834 = vrot.lane.b32.xlu0 %v752, 12
        %v835 = vpop.permute.xlu0 %834
        %836 = vrot.lane.b32.xlu0 %v753, 12
        %v837 = vpop.permute.xlu0 %836
        %838 = vrot.lane.b32.xlu0 %v754, 12
        %v839 = vpop.permute.xlu0 %838
        %840 = vrot.lane.b32.xlu0 %v755, 12
        %v841 = vpop.permute.xlu0 %840
        %842 = vrot.lane.b32.xlu0 %v756, 12
        %v843 = vpop.permute.xlu0 %842
        %844 = vrot.lane.b32.xlu0 %v757, 12
        %v845 = vpop.permute.xlu0 %844
        %846 = vrot.lane.b32.xlu0 %v758, 12
        %v847 = vpop.permute.xlu0 %846
        %848 = vrot.lane.b32.xlu0 %v759, 12
        %v849 = vpop.permute.xlu0 %848
        %850 = vrot.lane.b32.xlu0 %v760, 12
        %v851 = vpop.permute.xlu0 %850
        %852 = vrot.lane.b32.xlu0 %v761, 12
        %v853 = vpop.permute.xlu0 %852
        %854 = vrot.lane.b32.xlu0 %v762, 12
        %v855 = vpop.permute.xlu0 %854
        %856 = vrot.lane.b32.xlu0 %v763, 12
        %v857 = vpop.permute.xlu0 %856
        %858 = vrot.lane.b32.xlu0 %v764, 12
        %v859 = vpop.permute.xlu0 %858
        %860 = vrot.lane.b32.xlu0 %v765, 12
        %v861 = vpop.permute.xlu0 %860
        %vm894 = vcmask 130144
        %895 = vst.msk [vmem:[#allocation2] sm:$0xff] %vm894, %v799
        %896 = vst.msk [vmem:[#allocation2 + $0x8] sm:$0xff] %vm894, %v801
        %897 = vst.msk [vmem:[#allocation2 + $0x10] sm:$0xff] %vm894, %v803
        %898 = vst.msk [vmem:[#allocation2 + $0x18] sm:$0xff] %vm894, %v805
        %899 = vst.msk [vmem:[#allocation2 + $0x20] sm:$0xff] %vm894, %v807
        %900 = vst.msk [vmem:[#allocation2 + $0x28] sm:$0xff] %vm894, %v809
        %901 = vst.msk [vmem:[#allocation2 + $0x30] sm:$0xff] %vm894, %v811
        %902 = vst.msk [vmem:[#allocation2 + $0x38] sm:$0xff] %vm894, %v813
        %903 = vst.msk [vmem:[#allocation2 + $0x40] sm:$0xff] %vm894, %v815
        %904 = vst.msk [vmem:[#allocation2 + $0x48] sm:$0xff] %vm894, %v817
        %905 = vst.msk [vmem:[#allocation2 + $0x50] sm:$0xff] %vm894, %v819
        %906 = vst.msk [vmem:[#allocation2 + $0x58] sm:$0xff] %vm894, %v821
        %907 = vst.msk [vmem:[#allocation2 + $0x60] sm:$0xff] %vm894, %v823
        %908 = vst.msk [vmem:[#allocation2 + $0x68] sm:$0xff] %vm894, %v825
        %909 = vst.msk [vmem:[#allocation2 + $0x70] sm:$0xff] %vm894, %v827
        %910 = vst.msk [vmem:[#allocation2 + $0x78] sm:$0xff] %vm894, %v829
        %911 = vst.msk [vmem:[#allocation2 + $0x80] sm:$0xff] %vm894, %v831
        %912 = vst.msk [vmem:[#allocation2 + $0x88] sm:$0xff] %vm894, %v833
        %913 = vst.msk [vmem:[#allocation2 + $0x90] sm:$0xff] %vm894, %v835
        %914 = vst.msk [vmem:[#allocation2 + $0x98] sm:$0xff] %vm894, %v837
        %915 = vst.msk [vmem:[#allocation2 + $0xa0] sm:$0xff] %vm894, %v839
        %916 = vst.msk [vmem:[#allocation2 + $0xa8] sm:$0xff] %vm894, %v841
        %917 = vst.msk [vmem:[#allocation2 + $0xb0] sm:$0xff] %vm894, %v843
        %918 = vst.msk [vmem:[#allocation2 + $0xb8] sm:$0xff] %vm894, %v845
        %919 = vst.msk [vmem:[#allocation2 + $0xc0] sm:$0xff] %vm894, %v847
        %920 = vst.msk [vmem:[#allocation2 + $0xc8] sm:$0xff] %vm894, %v849
        %921 = vst.msk [vmem:[#allocation2 + $0xd0] sm:$0xff] %vm894, %v851
        %922 = vst.msk [vmem:[#allocation2 + $0xd8] sm:$0xff] %vm894, %v853
        %923 = vst.msk [vmem:[#allocation2 + $0xe0] sm:$0xff] %vm894, %v855
        %924 = vst.msk [vmem:[#allocation2 + $0xe8] sm:$0xff] %vm894, %v857
        %925 = vst.msk [vmem:[#allocation2 + $0xf0] sm:$0xff] %vm894, %v859
        %926 = vst.msk [vmem:[#allocation2 + $0xf8] sm:$0xff] %vm894, %v861
        %v927 = vld [vmem:[%s733 + $0x1] sm:$0xff]
        %v928 = vld [vmem:[%s733 + $0x9] sm:$0xff]
        %v929 = vld [vmem:[%s733 + $0x19] sm:$0xff]
        %v930 = vld [vmem:[%s733 + $0x21] sm:$0xff]
        %v931 = vld [vmem:[%s733 + $0x31] sm:$0xff]
        %v932 = vld [vmem:[%s733 + $0x39] sm:$0xff]
        %v933 = vld [vmem:[%s733 + $0x49] sm:$0xff]
        %v934 = vld [vmem:[%s733 + $0x51] sm:$0xff]
        %v935 = vld [vmem:[%s733 + $0x61] sm:$0xff]
        %v936 = vld [vmem:[%s733 + $0x69] sm:$0xff]
        %v937 = vld [vmem:[%s733 + $0x79] sm:$0xff]
        %v938 = vld [vmem:[%s733 + $0x81] sm:$0xff]
        %v939 = vld [vmem:[%s733 + $0x91] sm:$0xff]
        %v940 = vld [vmem:[%s733 + $0x99] sm:$0xff]
        %v941 = vld [vmem:[%s733 + $0xa9] sm:$0xff]
        %v942 = vld [vmem:[%s733 + $0xb1] sm:$0xff]
        %v943 = vld [vmem:[%s733 + $0xc1] sm:$0xff]
        %v944 = vld [vmem:[%s733 + $0xc9] sm:$0xff]
        %v945 = vld [vmem:[%s733 + $0xd9] sm:$0xff]
        %v946 = vld [vmem:[%s733 + $0xe1] sm:$0xff]
        %v947 = vld [vmem:[%s733 + $0xf1] sm:$0xff]
        %v948 = vld [vmem:[%s733 + $0xf9] sm:$0xff]
        %v949 = vld [vmem:[%s733 + $0x109] sm:$0xff]
        %v950 = vld [vmem:[%s733 + $0x111] sm:$0xff]
        %v951 = vld [vmem:[%s733 + $0x121] sm:$0xff]
        %v952 = vld [vmem:[%s733 + $0x129] sm:$0xff]
        %v953 = vld [vmem:[%s733 + $0x139] sm:$0xff]
        %v954 = vld [vmem:[%s733 + $0x141] sm:$0xff]
        %v955 = vld [vmem:[%s733 + $0x151] sm:$0xff]
        %v956 = vld [vmem:[%s733 + $0x159] sm:$0xff]
        %v957 = vld [vmem:[%s733 + $0x169] sm:$0xff]
        %v958 = vld [vmem:[%s733 + $0x171] sm:$0xff]
        %991 = vrot.lane.b32.xlu0 %v927, 16
        %v992 = vpop.permute.xlu0 %991
        %993 = vrot.lane.b32.xlu0 %v928, 16
        %v994 = vpop.permute.xlu0 %993
        %995 = vrot.lane.b32.xlu0 %v929, 16
        %v996 = vpop.permute.xlu0 %995
        %997 = vrot.lane.b32.xlu0 %v930, 16
        %v998 = vpop.permute.xlu0 %997
        %999 = vrot.lane.b32.xlu0 %v931, 16
        %v1000 = vpop.permute.xlu0 %999
        %1001 = vrot.lane.b32.xlu0 %v932, 16
        %v1002 = vpop.permute.xlu0 %1001
        %1003 = vrot.lane.b32.xlu0 %v933, 16
        %v1004 = vpop.permute.xlu0 %1003
        %1005 = vrot.lane.b32.xlu0 %v934, 16
        %v1006 = vpop.permute.xlu0 %1005
        %1007 = vrot.lane.b32.xlu0 %v935, 16
        %v1008 = vpop.permute.xlu0 %1007
        %1009 = vrot.lane.b32.xlu0 %v936, 16
        %v1010 = vpop.permute.xlu0 %1009
        %1011 = vrot.lane.b32.xlu0 %v937, 16
        %v1012 = vpop.permute.xlu0 %1011
        %1013 = vrot.lane.b32.xlu0 %v938, 16
        %v1014 = vpop.permute.xlu0 %1013
        %1015 = vrot.lane.b32.xlu0 %v939, 16
        %v1016 = vpop.permute.xlu0 %1015
        %1017 = vrot.lane.b32.xlu0 %v940, 16
        %v1018 = vpop.permute.xlu0 %1017
        %1019 = vrot.lane.b32.xlu0 %v941, 16
        %v1020 = vpop.permute.xlu0 %1019
        %1021 = vrot.lane.b32.xlu0 %v942, 16
        %v1022 = vpop.permute.xlu0 %1021
        %1023 = vrot.lane.b32.xlu0 %v943, 16
        %v1024 = vpop.permute.xlu0 %1023
        %1025 = vrot.lane.b32.xlu0 %v944, 16
        %v1026 = vpop.permute.xlu0 %1025
        %1027 = vrot.lane.b32.xlu0 %v945, 16
        %v1028 = vpop.permute.xlu0 %1027
        %1029 = vrot.lane.b32.xlu0 %v946, 16
        %v1030 = vpop.permute.xlu0 %1029
        %1031 = vrot.lane.b32.xlu0 %v947, 16
        %v1032 = vpop.permute.xlu0 %1031
        %1033 = vrot.lane.b32.xlu0 %v948, 16
        %v1034 = vpop.permute.xlu0 %1033
        %1035 = vrot.lane.b32.xlu0 %v949, 16
        %v1036 = vpop.permute.xlu0 %1035
        %1037 = vrot.lane.b32.xlu0 %v950, 16
        %v1038 = vpop.permute.xlu0 %1037
        %1039 = vrot.lane.b32.xlu0 %v951, 16
        %v1040 = vpop.permute.xlu0 %1039
        %1041 = vrot.lane.b32.xlu0 %v952, 16
        %v1042 = vpop.permute.xlu0 %1041
        %1043 = vrot.lane.b32.xlu0 %v953, 16
        %v1044 = vpop.permute.xlu0 %1043
        %1045 = vrot.lane.b32.xlu0 %v954, 16
        %v1046 = vpop.permute.xlu0 %1045
        %1047 = vrot.lane.b32.xlu0 %v955, 16
        %v1048 = vpop.permute.xlu0 %1047
        %1049 = vrot.lane.b32.xlu0 %v956, 16
        %v1050 = vpop.permute.xlu0 %1049
        %1051 = vrot.lane.b32.xlu0 %v957, 16
        %v1052 = vpop.permute.xlu0 %1051
        %1053 = vrot.lane.b32.xlu0 %v958, 16
        %v1054 = vpop.permute.xlu0 %1053
        %vm1087 = vcmask 162944
        %1088 = vst.msk [vmem:[#allocation2] sm:$0xff] %vm1087, %v992
        %1089 = vst.msk [vmem:[#allocation2 + $0x8] sm:$0xff] %vm1087, %v994
        %1090 = vst.msk [vmem:[#allocation2 + $0x10] sm:$0xff] %vm1087, %v996
        %1091 = vst.msk [vmem:[#allocation2 + $0x18] sm:$0xff] %vm1087, %v998
        %1092 = vst.msk [vmem:[#allocation2 + $0x20] sm:$0xff] %vm1087, %v1000
        %1093 = vst.msk [vmem:[#allocation2 + $0x28] sm:$0xff] %vm1087, %v1002
        %1094 = vst.msk [vmem:[#allocation2 + $0x30] sm:$0xff] %vm1087, %v1004
        %1095 = vst.msk [vmem:[#allocation2 + $0x38] sm:$0xff] %vm1087, %v1006
        %1096 = vst.msk [vmem:[#allocation2 + $0x40] sm:$0xff] %vm1087, %v1008
        %1097 = vst.msk [vmem:[#allocation2 + $0x48] sm:$0xff] %vm1087, %v1010
        %1098 = vst.msk [vmem:[#allocation2 + $0x50] sm:$0xff] %vm1087, %v1012
        %1099 = vst.msk [vmem:[#allocation2 + $0x58] sm:$0xff] %vm1087, %v1014
        %1100 = vst.msk [vmem:[#allocation2 + $0x60] sm:$0xff] %vm1087, %v1016
        %1101 = vst.msk [vmem:[#allocation2 + $0x68] sm:$0xff] %vm1087, %v1018
        %1102 = vst.msk [vmem:[#allocation2 + $0x70] sm:$0xff] %vm1087, %v1020
        %1103 = vst.msk [vmem:[#allocation2 + $0x78] sm:$0xff] %vm1087, %v1022
        %1104 = vst.msk [vmem:[#allocation2 + $0x80] sm:$0xff] %vm1087, %v1024
        %1105 = vst.msk [vmem:[#allocation2 + $0x88] sm:$0xff] %vm1087, %v1026
        %1106 = vst.msk [vmem:[#allocation2 + $0x90] sm:$0xff] %vm1087, %v1028
        %1107 = vst.msk [vmem:[#allocation2 + $0x98] sm:$0xff] %vm1087, %v1030
        %1108 = vst.msk [vmem:[#allocation2 + $0xa0] sm:$0xff] %vm1087, %v1032
        %1109 = vst.msk [vmem:[#allocation2 + $0xa8] sm:$0xff] %vm1087, %v1034
        %1110 = vst.msk [vmem:[#allocation2 + $0xb0] sm:$0xff] %vm1087, %v1036
        %1111 = vst.msk [vmem:[#allocation2 + $0xb8] sm:$0xff] %vm1087, %v1038
        %1112 = vst.msk [vmem:[#allocation2 + $0xc0] sm:$0xff] %vm1087, %v1040
        %1113 = vst.msk [vmem:[#allocation2 + $0xc8] sm:$0xff] %vm1087, %v1042
        %1114 = vst.msk [vmem:[#allocation2 + $0xd0] sm:$0xff] %vm1087, %v1044
        %1115 = vst.msk [vmem:[#allocation2 + $0xd8] sm:$0xff] %vm1087, %v1046
        %1116 = vst.msk [vmem:[#allocation2 + $0xe0] sm:$0xff] %vm1087, %v1048
        %1117 = vst.msk [vmem:[#allocation2 + $0xe8] sm:$0xff] %vm1087, %v1050
        %1118 = vst.msk [vmem:[#allocation2 + $0xf0] sm:$0xff] %vm1087, %v1052
        %1119 = vst.msk [vmem:[#allocation2 + $0xf8] sm:$0xff] %vm1087, %v1054
        %v1120 = vld [vmem:[%s733 + $0x2] sm:$0xff]
        %v1121 = vld [vmem:[%s733 + $0xa] sm:$0xff]
        %v1122 = vld [vmem:[%s733 + $0x1a] sm:$0xff]
        %v1123 = vld [vmem:[%s733 + $0x22] sm:$0xff]
        %v1124 = vld [vmem:[%s733 + $0x32] sm:$0xff]
        %v1125 = vld [vmem:[%s733 + $0x3a] sm:$0xff]
        %v1126 = vld [vmem:[%s733 + $0x4a] sm:$0xff]
        %v1127 = vld [vmem:[%s733 + $0x52] sm:$0xff]
        %v1128 = vld [vmem:[%s733 + $0x62] sm:$0xff]
        %v1129 = vld [vmem:[%s733 + $0x6a] sm:$0xff]
        %v1130 = vld [vmem:[%s733 + $0x7a] sm:$0xff]
        %v1131 = vld [vmem:[%s733 + $0x82] sm:$0xff]
        %v1132 = vld [vmem:[%s733 + $0x92] sm:$0xff]
        %v1133 = vld [vmem:[%s733 + $0x9a] sm:$0xff]
        %v1134 = vld [vmem:[%s733 + $0xaa] sm:$0xff]
        %v1135 = vld [vmem:[%s733 + $0xb2] sm:$0xff]
        %v1136 = vld [vmem:[%s733 + $0xc2] sm:$0xff]
        %v1137 = vld [vmem:[%s733 + $0xca] sm:$0xff]
        %v1138 = vld [vmem:[%s733 + $0xda] sm:$0xff]
        %v1139 = vld [vmem:[%s733 + $0xe2] sm:$0xff]
        %v1140 = vld [vmem:[%s733 + $0xf2] sm:$0xff]
        %v1141 = vld [vmem:[%s733 + $0xfa] sm:$0xff]
        %v1142 = vld [vmem:[%s733 + $0x10a] sm:$0xff]
        %v1143 = vld [vmem:[%s733 + $0x112] sm:$0xff]
        %v1144 = vld [vmem:[%s733 + $0x122] sm:$0xff]
        %v1145 = vld [vmem:[%s733 + $0x12a] sm:$0xff]
        %v1146 = vld [vmem:[%s733 + $0x13a] sm:$0xff]
        %v1147 = vld [vmem:[%s733 + $0x142] sm:$0xff]
        %v1148 = vld [vmem:[%s733 + $0x152] sm:$0xff]
        %v1149 = vld [vmem:[%s733 + $0x15a] sm:$0xff]
        %v1150 = vld [vmem:[%s733 + $0x16a] sm:$0xff]
        %v1151 = vld [vmem:[%s733 + $0x172] sm:$0xff]
        %1184 = vrot.lane.b32.xlu0 %v1120, 20
        %v1185 = vpop.permute.xlu0 %1184
        %1186 = vrot.lane.b32.xlu0 %v1121, 20
        %v1187 = vpop.permute.xlu0 %1186
        %1188 = vrot.lane.b32.xlu0 %v1122, 20
        %v1189 = vpop.permute.xlu0 %1188
        %1190 = vrot.lane.b32.xlu0 %v1123, 20
        %v1191 = vpop.permute.xlu0 %1190
        %1192 = vrot.lane.b32.xlu0 %v1124, 20
        %v1193 = vpop.permute.xlu0 %1192
        %1194 = vrot.lane.b32.xlu0 %v1125, 20
        %v1195 = vpop.permute.xlu0 %1194
        %1196 = vrot.lane.b32.xlu0 %v1126, 20
        %v1197 = vpop.permute.xlu0 %1196
        %1198 = vrot.lane.b32.xlu0 %v1127, 20
        %v1199 = vpop.permute.xlu0 %1198
        %1200 = vrot.lane.b32.xlu0 %v1128, 20
        %v1201 = vpop.permute.xlu0 %1200
        %1202 = vrot.lane.b32.xlu0 %v1129, 20
        %v1203 = vpop.permute.xlu0 %1202
        %1204 = vrot.lane.b32.xlu0 %v1130, 20
        %v1205 = vpop.permute.xlu0 %1204
        %1206 = vrot.lane.b32.xlu0 %v1131, 20
        %v1207 = vpop.permute.xlu0 %1206
        %1208 = vrot.lane.b32.xlu0 %v1132, 20
        %v1209 = vpop.permute.xlu0 %1208
        %1210 = vrot.lane.b32.xlu0 %v1133, 20
        %v1211 = vpop.permute.xlu0 %1210
        %1212 = vrot.lane.b32.xlu0 %v1134, 20
        %v1213 = vpop.permute.xlu0 %1212
        %1214 = vrot.lane.b32.xlu0 %v1135, 20
        %v1215 = vpop.permute.xlu0 %1214
        %1216 = vrot.lane.b32.xlu0 %v1136, 20
        %v1217 = vpop.permute.xlu0 %1216
        %1218 = vrot.lane.b32.xlu0 %v1137, 20
        %v1219 = vpop.permute.xlu0 %1218
        %1220 = vrot.lane.b32.xlu0 %v1138, 20
        %v1221 = vpop.permute.xlu0 %1220
        %1222 = vrot.lane.b32.xlu0 %v1139, 20
        %v1223 = vpop.permute.xlu0 %1222
        %1224 = vrot.lane.b32.xlu0 %v1140, 20
        %v1225 = vpop.permute.xlu0 %1224
        %1226 = vrot.lane.b32.xlu0 %v1141, 20
        %v1227 = vpop.permute.xlu0 %1226
        %1228 = vrot.lane.b32.xlu0 %v1142, 20
        %v1229 = vpop.permute.xlu0 %1228
        %1230 = vrot.lane.b32.xlu0 %v1143, 20
        %v1231 = vpop.permute.xlu0 %1230
        %1232 = vrot.lane.b32.xlu0 %v1144, 20
        %v1233 = vpop.permute.xlu0 %1232
        %1234 = vrot.lane.b32.xlu0 %v1145, 20
        %v1235 = vpop.permute.xlu0 %1234
        %1236 = vrot.lane.b32.xlu0 %v1146, 20
        %v1237 = vpop.permute.xlu0 %1236
        %1238 = vrot.lane.b32.xlu0 %v1147, 20
        %v1239 = vpop.permute.xlu0 %1238
        %1240 = vrot.lane.b32.xlu0 %v1148, 20
        %v1241 = vpop.permute.xlu0 %1240
        %1242 = vrot.lane.b32.xlu0 %v1149, 20
        %v1243 = vpop.permute.xlu0 %1242
        %1244 = vrot.lane.b32.xlu0 %v1150, 20
        %v1245 = vpop.permute.xlu0 %1244
        %1246 = vrot.lane.b32.xlu0 %v1151, 20
        %v1247 = vpop.permute.xlu0 %1246
        %vm1280 = vcmask 195744
        %1281 = vst.msk [vmem:[#allocation2] sm:$0xff] %vm1280, %v1185
        %1282 = vst.msk [vmem:[#allocation2 + $0x8] sm:$0xff] %vm1280, %v1187
        %1283 = vst.msk [vmem:[#allocation2 + $0x10] sm:$0xff] %vm1280, %v1189
        %1284 = vst.msk [vmem:[#allocation2 + $0x18] sm:$0xff] %vm1280, %v1191
        %1285 = vst.msk [vmem:[#allocation2 + $0x20] sm:$0xff] %vm1280, %v1193
        %1286 = vst.msk [vmem:[#allocation2 + $0x28] sm:$0xff] %vm1280, %v1195
        %1287 = vst.msk [vmem:[#allocation2 + $0x30] sm:$0xff] %vm1280, %v1197
        %1288 = vst.msk [vmem:[#allocation2 + $0x38] sm:$0xff] %vm1280, %v1199
        %1289 = vst.msk [vmem:[#allocation2 + $0x40] sm:$0xff] %vm1280, %v1201
        %1290 = vst.msk [vmem:[#allocation2 + $0x48] sm:$0xff] %vm1280, %v1203
        %1291 = vst.msk [vmem:[#allocation2 + $0x50] sm:$0xff] %vm1280, %v1205
        %1292 = vst.msk [vmem:[#allocation2 + $0x58] sm:$0xff] %vm1280, %v1207
        %1293 = vst.msk [vmem:[#allocation2 + $0x60] sm:$0xff] %vm1280, %v1209
        %1294 = vst.msk [vmem:[#allocation2 + $0x68] sm:$0xff] %vm1280, %v1211
        %1295 = vst.msk [vmem:[#allocation2 + $0x70] sm:$0xff] %vm1280, %v1213
        %1296 = vst.msk [vmem:[#allocation2 + $0x78] sm:$0xff] %vm1280, %v1215
        %1297 = vst.msk [vmem:[#allocation2 + $0x80] sm:$0xff] %vm1280, %v1217
        %1298 = vst.msk [vmem:[#allocation2 + $0x88] sm:$0xff] %vm1280, %v1219
        %1299 = vst.msk [vmem:[#allocation2 + $0x90] sm:$0xff] %vm1280, %v1221
        %1300 = vst.msk [vmem:[#allocation2 + $0x98] sm:$0xff] %vm1280, %v1223
        %1301 = vst.msk [vmem:[#allocation2 + $0xa0] sm:$0xff] %vm1280, %v1225
        %1302 = vst.msk [vmem:[#allocation2 + $0xa8] sm:$0xff] %vm1280, %v1227
        %1303 = vst.msk [vmem:[#allocation2 + $0xb0] sm:$0xff] %vm1280, %v1229
        %1304 = vst.msk [vmem:[#allocation2 + $0xb8] sm:$0xff] %vm1280, %v1231
        %1305 = vst.msk [vmem:[#allocation2 + $0xc0] sm:$0xff] %vm1280, %v1233
        %1306 = vst.msk [vmem:[#allocation2 + $0xc8] sm:$0xff] %vm1280, %v1235
        %1307 = vst.msk [vmem:[#allocation2 + $0xd0] sm:$0xff] %vm1280, %v1237
        %1308 = vst.msk [vmem:[#allocation2 + $0xd8] sm:$0xff] %vm1280, %v1239
        %1309 = vst.msk [vmem:[#allocation2 + $0xe0] sm:$0xff] %vm1280, %v1241
        %1310 = vst.msk [vmem:[#allocation2 + $0xe8] sm:$0xff] %vm1280, %v1243
        %1311 = vst.msk [vmem:[#allocation2 + $0xf0] sm:$0xff] %vm1280, %v1245
        %1312 = vst.msk [vmem:[#allocation2 + $0xf8] sm:$0xff] %vm1280, %v1247
        %s1313 = sadd.s32 %s277, 2
        %s1314 = smul.u32 %s1313, 24
        %s1315 = scalar_lea.vmem %s219, %s1314
        %v1316 = vld [vmem:[%s1315] sm:$0xff]
        %v1317 = vld [vmem:[%s1315 + $0x8] sm:$0xff]
        %v1318 = vld [vmem:[%s1315 + $0x18] sm:$0xff]
        %v1319 = vld [vmem:[%s1315 + $0x20] sm:$0xff]
        %v1320 = vld [vmem:[%s1315 + $0x30] sm:$0xff]
        %v1321 = vld [vmem:[%s1315 + $0x38] sm:$0xff]
        %v1322 = vld [vmem:[%s1315 + $0x48] sm:$0xff]
        %v1323 = vld [vmem:[%s1315 + $0x50] sm:$0xff]
        %v1324 = vld [vmem:[%s1315 + $0x60] sm:$0xff]
        %v1325 = vld [vmem:[%s1315 + $0x68] sm:$0xff]
        %v1326 = vld [vmem:[%s1315 + $0x78] sm:$0xff]
        %v1327 = vld [vmem:[%s1315 + $0x80] sm:$0xff]
        %v1328 = vld [vmem:[%s1315 + $0x90] sm:$0xff]
        %v1329 = vld [vmem:[%s1315 + $0x98] sm:$0xff]
        %v1330 = vld [vmem:[%s1315 + $0xa8] sm:$0xff]
        %v1331 = vld [vmem:[%s1315 + $0xb0] sm:$0xff]
        %v1332 = vld [vmem:[%s1315 + $0xc0] sm:$0xff]
        %v1333 = vld [vmem:[%s1315 + $0xc8] sm:$0xff]
        %v1334 = vld [vmem:[%s1315 + $0xd8] sm:$0xff]
        %v1335 = vld [vmem:[%s1315 + $0xe0] sm:$0xff]
        %v1336 = vld [vmem:[%s1315 + $0xf0] sm:$0xff]
        %v1337 = vld [vmem:[%s1315 + $0xf8] sm:$0xff]
        %v1338 = vld [vmem:[%s1315 + $0x108] sm:$0xff]
        %v1339 = vld [vmem:[%s1315 + $0x110] sm:$0xff]
        %v1340 = vld [vmem:[%s1315 + $0x120] sm:$0xff]
        %v1341 = vld [vmem:[%s1315 + $0x128] sm:$0xff]
        %v1342 = vld [vmem:[%s1315 + $0x138] sm:$0xff]
        %v1343 = vld [vmem:[%s1315 + $0x140] sm:$0xff]
        %v1344 = vld [vmem:[%s1315 + $0x150] sm:$0xff]
        %v1345 = vld [vmem:[%s1315 + $0x158] sm:$0xff]
        %v1346 = vld [vmem:[%s1315 + $0x168] sm:$0xff]
        %v1347 = vld [vmem:[%s1315 + $0x170] sm:$0xff]
        %1380 = vrot.lane.b32.xlu0 %v1316, 24
        %v1381 = vpop.permute.xlu0 %1380
        %1382 = vrot.lane.b32.xlu0 %v1317, 24
        %v1383 = vpop.permute.xlu0 %1382
        %1384 = vrot.lane.b32.xlu0 %v1318, 24
        %v1385 = vpop.permute.xlu0 %1384
        %1386 = vrot.lane.b32.xlu0 %v1319, 24
        %v1387 = vpop.permute.xlu0 %1386
        %1388 = vrot.lane.b32.xlu0 %v1320, 24
        %v1389 = vpop.permute.xlu0 %1388
        %1390 = vrot.lane.b32.xlu0 %v1321, 24
        %v1391 = vpop.permute.xlu0 %1390
        %1392 = vrot.lane.b32.xlu0 %v1322, 24
        %v1393 = vpop.permute.xlu0 %1392
        %1394 = vrot.lane.b32.xlu0 %v1323, 24
        %v1395 = vpop.permute.xlu0 %1394
        %1396 = vrot.lane.b32.xlu0 %v1324, 24
        %v1397 = vpop.permute.xlu0 %1396
        %1398 = vrot.lane.b32.xlu0 %v1325, 24
        %v1399 = vpop.permute.xlu0 %1398
        %1400 = vrot.lane.b32.xlu0 %v1326, 24
        %v1401 = vpop.permute.xlu0 %1400
        %1402 = vrot.lane.b32.xlu0 %v1327, 24
        %v1403 = vpop.permute.xlu0 %1402
        %1404 = vrot.lane.b32.xlu0 %v1328, 24
        %v1405 = vpop.permute.xlu0 %1404
        %1406 = vrot.lane.b32.xlu0 %v1329, 24
        %v1407 = vpop.permute.xlu0 %1406
        %1408 = vrot.lane.b32.xlu0 %v1330, 24
        %v1409 = vpop.permute.xlu0 %1408
        %1410 = vrot.lane.b32.xlu0 %v1331, 24
        %v1411 = vpop.permute.xlu0 %1410
        %1412 = vrot.lane.b32.xlu0 %v1332, 24
        %v1413 = vpop.permute.xlu0 %1412
        %1414 = vrot.lane.b32.xlu0 %v1333, 24
        %v1415 = vpop.permute.xlu0 %1414
        %1416 = vrot.lane.b32.xlu0 %v1334, 24
        %v1417 = vpop.permute.xlu0 %1416
        %1418 = vrot.lane.b32.xlu0 %v1335, 24
        %v1419 = vpop.permute.xlu0 %1418
        %1420 = vrot.lane.b32.xlu0 %v1336, 24
        %v1421 = vpop.permute.xlu0 %1420
        %1422 = vrot.lane.b32.xlu0 %v1337, 24
        %v1423 = vpop.permute.xlu0 %1422
        %1424 = vrot.lane.b32.xlu0 %v1338, 24
        %v1425 = vpop.permute.xlu0 %1424
        %1426 = vrot.lane.b32.xlu0 %v1339, 24
        %v1427 = vpop.permute.xlu0 %1426
        %1428 = vrot.lane.b32.xlu0 %v1340, 24
        %v1429 = vpop.permute.xlu0 %1428
        %1430 = vrot.lane.b32.xlu0 %v1341, 24
        %v1431 = vpop.permute.xlu0 %1430
        %1432 = vrot.lane.b32.xlu0 %v1342, 24
        %v1433 = vpop.permute.xlu0 %1432
        %1434 = vrot.lane.b32.xlu0 %v1343, 24
        %v1435 = vpop.permute.xlu0 %1434
        %1436 = vrot.lane.b32.xlu0 %v1344, 24
        %v1437 = vpop.permute.xlu0 %1436
        %1438 = vrot.lane.b32.xlu0 %v1345, 24
        %v1439 = vpop.permute.xlu0 %1438
        %1440 = vrot.lane.b32.xlu0 %v1346, 24
        %v1441 = vpop.permute.xlu0 %1440
        %1442 = vrot.lane.b32.xlu0 %v1347, 24
        %v1443 = vpop.permute.xlu0 %1442
        %vm1476 = vcmask 228544
        %1477 = vst.msk [vmem:[#allocation2] sm:$0xff] %vm1476, %v1381
        %1478 = vst.msk [vmem:[#allocation2 + $0x8] sm:$0xff] %vm1476, %v1383
        %1479 = vst.msk [vmem:[#allocation2 + $0x10] sm:$0xff] %vm1476, %v1385
        %1480 = vst.msk [vmem:[#allocation2 + $0x18] sm:$0xff] %vm1476, %v1387
        %1481 = vst.msk [vmem:[#allocation2 + $0x20] sm:$0xff] %vm1476, %v1389
        %1482 = vst.msk [vmem:[#allocation2 + $0x28] sm:$0xff] %vm1476, %v1391
        %1483 = vst.msk [vmem:[#allocation2 + $0x30] sm:$0xff] %vm1476, %v1393
        %1484 = vst.msk [vmem:[#allocation2 + $0x38] sm:$0xff] %vm1476, %v1395
        %1485 = vst.msk [vmem:[#allocation2 + $0x40] sm:$0xff] %vm1476, %v1397
        %1486 = vst.msk [vmem:[#allocation2 + $0x48] sm:$0xff] %vm1476, %v1399
        %1487 = vst.msk [vmem:[#allocation2 + $0x50] sm:$0xff] %vm1476, %v1401
        %1488 = vst.msk [vmem:[#allocation2 + $0x58] sm:$0xff] %vm1476, %v1403
        %1489 = vst.msk [vmem:[#allocation2 + $0x60] sm:$0xff] %vm1476, %v1405
        %1490 = vst.msk [vmem:[#allocation2 + $0x68] sm:$0xff] %vm1476, %v1407
        %1491 = vst.msk [vmem:[#allocation2 + $0x70] sm:$0xff] %vm1476, %v1409
        %1492 = vst.msk [vmem:[#allocation2 + $0x78] sm:$0xff] %vm1476, %v1411
        %1493 = vst.msk [vmem:[#allocation2 + $0x80] sm:$0xff] %vm1476, %v1413
        %1494 = vst.msk [vmem:[#allocation2 + $0x88] sm:$0xff] %vm1476, %v1415
        %1495 = vst.msk [vmem:[#allocation2 + $0x90] sm:$0xff] %vm1476, %v1417
        %1496 = vst.msk [vmem:[#allocation2 + $0x98] sm:$0xff] %vm1476, %v1419
        %1497 = vst.msk [vmem:[#allocation2 + $0xa0] sm:$0xff] %vm1476, %v1421
        %1498 = vst.msk [vmem:[#allocation2 + $0xa8] sm:$0xff] %vm1476, %v1423
        %1499 = vst.msk [vmem:[#allocation2 + $0xb0] sm:$0xff] %vm1476, %v1425
        %1500 = vst.msk [vmem:[#allocation2 + $0xb8] sm:$0xff] %vm1476, %v1427
        %1501 = vst.msk [vmem:[#allocation2 + $0xc0] sm:$0xff] %vm1476, %v1429
        %1502 = vst.msk [vmem:[#allocation2 + $0xc8] sm:$0xff] %vm1476, %v1431
        %1503 = vst.msk [vmem:[#allocation2 + $0xd0] sm:$0xff] %vm1476, %v1433
        %1504 = vst.msk [vmem:[#allocation2 + $0xd8] sm:$0xff] %vm1476, %v1435
        %1505 = vst.msk [vmem:[#allocation2 + $0xe0] sm:$0xff] %vm1476, %v1437
        %1506 = vst.msk [vmem:[#allocation2 + $0xe8] sm:$0xff] %vm1476, %v1439
        %1507 = vst.msk [vmem:[#allocation2 + $0xf0] sm:$0xff] %vm1476, %v1441
        %1508 = vst.msk [vmem:[#allocation2 + $0xf8] sm:$0xff] %vm1476, %v1443
        %v1509 = vld [vmem:[%s1315 + $0x1] sm:$0xff]
        %v1510 = vld [vmem:[%s1315 + $0x9] sm:$0xff]
        %v1511 = vld [vmem:[%s1315 + $0x19] sm:$0xff]
        %v1512 = vld [vmem:[%s1315 + $0x21] sm:$0xff]
        %v1513 = vld [vmem:[%s1315 + $0x31] sm:$0xff]
        %v1514 = vld [vmem:[%s1315 + $0x39] sm:$0xff]
        %v1515 = vld [vmem:[%s1315 + $0x49] sm:$0xff]
        %v1516 = vld [vmem:[%s1315 + $0x51] sm:$0xff]
        %v1517 = vld [vmem:[%s1315 + $0x61] sm:$0xff]
        %v1518 = vld [vmem:[%s1315 + $0x69] sm:$0xff]
        %v1519 = vld [vmem:[%s1315 + $0x79] sm:$0xff]
        %v1520 = vld [vmem:[%s1315 + $0x81] sm:$0xff]
        %v1521 = vld [vmem:[%s1315 + $0x91] sm:$0xff]
        %v1522 = vld [vmem:[%s1315 + $0x99] sm:$0xff]
        %v1523 = vld [vmem:[%s1315 + $0xa9] sm:$0xff]
        %v1524 = vld [vmem:[%s1315 + $0xb1] sm:$0xff]
        %v1525 = vld [vmem:[%s1315 + $0xc1] sm:$0xff]
        %v1526 = vld [vmem:[%s1315 + $0xc9] sm:$0xff]
        %v1527 = vld [vmem:[%s1315 + $0xd9] sm:$0xff]
        %v1528 = vld [vmem:[%s1315 + $0xe1] sm:$0xff]
        %v1529 = vld [vmem:[%s1315 + $0xf1] sm:$0xff]
        %v1530 = vld [vmem:[%s1315 + $0xf9] sm:$0xff]
        %v1531 = vld [vmem:[%s1315 + $0x109] sm:$0xff]
        %v1532 = vld [vmem:[%s1315 + $0x111] sm:$0xff]
        %v1533 = vld [vmem:[%s1315 + $0x121] sm:$0xff]
        %v1534 = vld [vmem:[%s1315 + $0x129] sm:$0xff]
        %v1535 = vld [vmem:[%s1315 + $0x139] sm:$0xff]
        %v1536 = vld [vmem:[%s1315 + $0x141] sm:$0xff]
        %v1537 = vld [vmem:[%s1315 + $0x151] sm:$0xff]
        %v1538 = vld [vmem:[%s1315 + $0x159] sm:$0xff]
        %v1539 = vld [vmem:[%s1315 + $0x169] sm:$0xff]
        %v1540 = vld [vmem:[%s1315 + $0x171] sm:$0xff]
        %1573 = vrot.lane.b32.xlu0 %v1509, 28
        %v1574 = vpop.permute.xlu0 %1573
        %1575 = vrot.lane.b32.xlu0 %v1510, 28
        %v1576 = vpop.permute.xlu0 %1575
        %1577 = vrot.lane.b32.xlu0 %v1511, 28
        %v1578 = vpop.permute.xlu0 %1577
        %1579 = vrot.lane.b32.xlu0 %v1512, 28
        %v1580 = vpop.permute.xlu0 %1579
        %1581 = vrot.lane.b32.xlu0 %v1513, 28
        %v1582 = vpop.permute.xlu0 %1581
        %1583 = vrot.lane.b32.xlu0 %v1514, 28
        %v1584 = vpop.permute.xlu0 %1583
        %1585 = vrot.lane.b32.xlu0 %v1515, 28
        %v1586 = vpop.permute.xlu0 %1585
        %1587 = vrot.lane.b32.xlu0 %v1516, 28
        %v1588 = vpop.permute.xlu0 %1587
        %1589 = vrot.lane.b32.xlu0 %v1517, 28
        %v1590 = vpop.permute.xlu0 %1589
        %1591 = vrot.lane.b32.xlu0 %v1518, 28
        %v1592 = vpop.permute.xlu0 %1591
        %1593 = vrot.lane.b32.xlu0 %v1519, 28
        %v1594 = vpop.permute.xlu0 %1593
        %1595 = vrot.lane.b32.xlu0 %v1520, 28
        %v1596 = vpop.permute.xlu0 %1595
        %1597 = vrot.lane.b32.xlu0 %v1521, 28
        %v1598 = vpop.permute.xlu0 %1597
        %1599 = vrot.lane.b32.xlu0 %v1522, 28
        %v1600 = vpop.permute.xlu0 %1599
        %1601 = vrot.lane.b32.xlu0 %v1523, 28
        %v1602 = vpop.permute.xlu0 %1601
        %1603 = vrot.lane.b32.xlu0 %v1524, 28
        %v1604 = vpop.permute.xlu0 %1603
        %1605 = vrot.lane.b32.xlu0 %v1525, 28
        %v1606 = vpop.permute.xlu0 %1605
        %1607 = vrot.lane.b32.xlu0 %v1526, 28
        %v1608 = vpop.permute.xlu0 %1607
        %1609 = vrot.lane.b32.xlu0 %v1527, 28
        %v1610 = vpop.permute.xlu0 %1609
        %1611 = vrot.lane.b32.xlu0 %v1528, 28
        %v1612 = vpop.permute.xlu0 %1611
        %1613 = vrot.lane.b32.xlu0 %v1529, 28
        %v1614 = vpop.permute.xlu0 %1613
        %1615 = vrot.lane.b32.xlu0 %v1530, 28
        %v1616 = vpop.permute.xlu0 %1615
        %1617 = vrot.lane.b32.xlu0 %v1531, 28
        %v1618 = vpop.permute.xlu0 %1617
        %1619 = vrot.lane.b32.xlu0 %v1532, 28
        %v1620 = vpop.permute.xlu0 %1619
        %1621 = vrot.lane.b32.xlu0 %v1533, 28
        %v1622 = vpop.permute.xlu0 %1621
        %1623 = vrot.lane.b32.xlu0 %v1534, 28
        %v1624 = vpop.permute.xlu0 %1623
        %1625 = vrot.lane.b32.xlu0 %v1535, 28
        %v1626 = vpop.permute.xlu0 %1625
        %1627 = vrot.lane.b32.xlu0 %v1536, 28
        %v1628 = vpop.permute.xlu0 %1627
        %1629 = vrot.lane.b32.xlu0 %v1537, 28
        %v1630 = vpop.permute.xlu0 %1629
        %1631 = vrot.lane.b32.xlu0 %v1538, 28
        %v1632 = vpop.permute.xlu0 %1631
        %1633 = vrot.lane.b32.xlu0 %v1539, 28
        %v1634 = vpop.permute.xlu0 %1633
        %1635 = vrot.lane.b32.xlu0 %v1540, 28
        %v1636 = vpop.permute.xlu0 %1635
        %vm1669 = vcmask 261344
        %1670 = vst.msk [vmem:[#allocation2] sm:$0xff] %vm1669, %v1574
        %1671 = vst.msk [vmem:[#allocation2 + $0x8] sm:$0xff] %vm1669, %v1576
        %1672 = vst.msk [vmem:[#allocation2 + $0x10] sm:$0xff] %vm1669, %v1578
        %1673 = vst.msk [vmem:[#allocation2 + $0x18] sm:$0xff] %vm1669, %v1580
        %1674 = vst.msk [vmem:[#allocation2 + $0x20] sm:$0xff] %vm1669, %v1582
        %1675 = vst.msk [vmem:[#allocation2 + $0x28] sm:$0xff] %vm1669, %v1584
        %1676 = vst.msk [vmem:[#allocation2 + $0x30] sm:$0xff] %vm1669, %v1586
        %1677 = vst.msk [vmem:[#allocation2 + $0x38] sm:$0xff] %vm1669, %v1588
        %1678 = vst.msk [vmem:[#allocation2 + $0x40] sm:$0xff] %vm1669, %v1590
        %1679 = vst.msk [vmem:[#allocation2 + $0x48] sm:$0xff] %vm1669, %v1592
        %1680 = vst.msk [vmem:[#allocation2 + $0x50] sm:$0xff] %vm1669, %v1594
        %1681 = vst.msk [vmem:[#allocation2 + $0x58] sm:$0xff] %vm1669, %v1596
        %1682 = vst.msk [vmem:[#allocation2 + $0x60] sm:$0xff] %vm1669, %v1598
        %1683 = vst.msk [vmem:[#allocation2 + $0x68] sm:$0xff] %vm1669, %v1600
        %1684 = vst.msk [vmem:[#allocation2 + $0x70] sm:$0xff] %vm1669, %v1602
        %1685 = vst.msk [vmem:[#allocation2 + $0x78] sm:$0xff] %vm1669, %v1604
        %1686 = vst.msk [vmem:[#allocation2 + $0x80] sm:$0xff] %vm1669, %v1606
        %1687 = vst.msk [vmem:[#allocation2 + $0x88] sm:$0xff] %vm1669, %v1608
        %1688 = vst.msk [vmem:[#allocation2 + $0x90] sm:$0xff] %vm1669, %v1610
        %1689 = vst.msk [vmem:[#allocation2 + $0x98] sm:$0xff] %vm1669, %v1612
        %1690 = vst.msk [vmem:[#allocation2 + $0xa0] sm:$0xff] %vm1669, %v1614
        %1691 = vst.msk [vmem:[#allocation2 + $0xa8] sm:$0xff] %vm1669, %v1616
        %1692 = vst.msk [vmem:[#allocation2 + $0xb0] sm:$0xff] %vm1669, %v1618
        %1693 = vst.msk [vmem:[#allocation2 + $0xb8] sm:$0xff] %vm1669, %v1620
        %1694 = vst.msk [vmem:[#allocation2 + $0xc0] sm:$0xff] %vm1669, %v1622
        %1695 = vst.msk [vmem:[#allocation2 + $0xc8] sm:$0xff] %vm1669, %v1624
        %1696 = vst.msk [vmem:[#allocation2 + $0xd0] sm:$0xff] %vm1669, %v1626
        %1697 = vst.msk [vmem:[#allocation2 + $0xd8] sm:$0xff] %vm1669, %v1628
        %1698 = vst.msk [vmem:[#allocation2 + $0xe0] sm:$0xff] %vm1669, %v1630
        %1699 = vst.msk [vmem:[#allocation2 + $0xe8] sm:$0xff] %vm1669, %v1632
        %1700 = vst.msk [vmem:[#allocation2 + $0xf0] sm:$0xff] %vm1669, %v1634
        %1701 = vst.msk [vmem:[#allocation2 + $0xf8] sm:$0xff] %vm1669, %v1636
        %v1702 = vld [vmem:[%s1315 + $0x2] sm:$0xff]
        %v1703 = vld [vmem:[%s1315 + $0xa] sm:$0xff]
        %v1704 = vld [vmem:[%s1315 + $0x1a] sm:$0xff]
        %v1705 = vld [vmem:[%s1315 + $0x22] sm:$0xff]
        %v1706 = vld [vmem:[%s1315 + $0x32] sm:$0xff]
        %v1707 = vld [vmem:[%s1315 + $0x3a] sm:$0xff]
        %v1708 = vld [vmem:[%s1315 + $0x4a] sm:$0xff]
        %v1709 = vld [vmem:[%s1315 + $0x52] sm:$0xff]
        %v1710 = vld [vmem:[%s1315 + $0x62] sm:$0xff]
        %v1711 = vld [vmem:[%s1315 + $0x6a] sm:$0xff]
        %v1712 = vld [vmem:[%s1315 + $0x7a] sm:$0xff]
        %v1713 = vld [vmem:[%s1315 + $0x82] sm:$0xff]
        %v1714 = vld [vmem:[%s1315 + $0x92] sm:$0xff]
        %v1715 = vld [vmem:[%s1315 + $0x9a] sm:$0xff]
        %v1716 = vld [vmem:[%s1315 + $0xaa] sm:$0xff]
        %v1717 = vld [vmem:[%s1315 + $0xb2] sm:$0xff]
        %v1718 = vld [vmem:[%s1315 + $0xc2] sm:$0xff]
        %v1719 = vld [vmem:[%s1315 + $0xca] sm:$0xff]
        %v1720 = vld [vmem:[%s1315 + $0xda] sm:$0xff]
        %v1721 = vld [vmem:[%s1315 + $0xe2] sm:$0xff]
        %v1722 = vld [vmem:[%s1315 + $0xf2] sm:$0xff]
        %v1723 = vld [vmem:[%s1315 + $0xfa] sm:$0xff]
        %v1724 = vld [vmem:[%s1315 + $0x10a] sm:$0xff]
        %v1725 = vld [vmem:[%s1315 + $0x112] sm:$0xff]
        %v1726 = vld [vmem:[%s1315 + $0x122] sm:$0xff]
        %v1727 = vld [vmem:[%s1315 + $0x12a] sm:$0xff]
        %v1728 = vld [vmem:[%s1315 + $0x13a] sm:$0xff]
        %v1729 = vld [vmem:[%s1315 + $0x142] sm:$0xff]
        %v1730 = vld [vmem:[%s1315 + $0x152] sm:$0xff]
        %v1731 = vld [vmem:[%s1315 + $0x15a] sm:$0xff]
        %v1732 = vld [vmem:[%s1315 + $0x16a] sm:$0xff]
        %v1733 = vld [vmem:[%s1315 + $0x172] sm:$0xff]
        %1766 = vrot.lane.b32.xlu0 %v1702, 32
        %v1767 = vpop.permute.xlu0 %1766
        %1768 = vrot.lane.b32.xlu0 %v1703, 32
        %v1769 = vpop.permute.xlu0 %1768
        %1770 = vrot.lane.b32.xlu0 %v1704, 32
        %v1771 = vpop.permute.xlu0 %1770
        %1772 = vrot.lane.b32.xlu0 %v1705, 32
        %v1773 = vpop.permute.xlu0 %1772
        %1774 = vrot.lane.b32.xlu0 %v1706, 32
        %v1775 = vpop.permute.xlu0 %1774
        %1776 = vrot.lane.b32.xlu0 %v1707, 32
        %v1777 = vpop.permute.xlu0 %1776
        %1778 = vrot.lane.b32.xlu0 %v1708, 32
        %v1779 = vpop.permute.xlu0 %1778
        %1780 = vrot.lane.b32.xlu0 %v1709, 32
        %v1781 = vpop.permute.xlu0 %1780
        %1782 = vrot.lane.b32.xlu0 %v1710, 32
        %v1783 = vpop.permute.xlu0 %1782
        %1784 = vrot.lane.b32.xlu0 %v1711, 32
        %v1785 = vpop.permute.xlu0 %1784
        %1786 = vrot.lane.b32.xlu0 %v1712, 32
        %v1787 = vpop.permute.xlu0 %1786
        %1788 = vrot.lane.b32.xlu0 %v1713, 32
        %v1789 = vpop.permute.xlu0 %1788
        %1790 = vrot.lane.b32.xlu0 %v1714, 32
        %v1791 = vpop.permute.xlu0 %1790
        %1792 = vrot.lane.b32.xlu0 %v1715, 32
        %v1793 = vpop.permute.xlu0 %1792
        %1794 = vrot.lane.b32.xlu0 %v1716, 32
        %v1795 = vpop.permute.xlu0 %1794
        %1796 = vrot.lane.b32.xlu0 %v1717, 32
        %v1797 = vpop.permute.xlu0 %1796
        %1798 = vrot.lane.b32.xlu0 %v1718, 32
        %v1799 = vpop.permute.xlu0 %1798
        %1800 = vrot.lane.b32.xlu0 %v1719, 32
        %v1801 = vpop.permute.xlu0 %1800
        %1802 = vrot.lane.b32.xlu0 %v1720, 32
        %v1803 = vpop.permute.xlu0 %1802
        %1804 = vrot.lane.b32.xlu0 %v1721, 32
        %v1805 = vpop.permute.xlu0 %1804
        %1806 = vrot.lane.b32.xlu0 %v1722, 32
        %v1807 = vpop.permute.xlu0 %1806
        %1808 = vrot.lane.b32.xlu0 %v1723, 32
        %v1809 = vpop.permute.xlu0 %1808
        %1810 = vrot.lane.b32.xlu0 %v1724, 32
        %v1811 = vpop.permute.xlu0 %1810
        %1812 = vrot.lane.b32.xlu0 %v1725, 32
        %v1813 = vpop.permute.xlu0 %1812
        %1814 = vrot.lane.b32.xlu0 %v1726, 32
        %v1815 = vpop.permute.xlu0 %1814
        %1816 = vrot.lane.b32.xlu0 %v1727, 32
        %v1817 = vpop.permute.xlu0 %1816
        %1818 = vrot.lane.b32.xlu0 %v1728, 32
        %v1819 = vpop.permute.xlu0 %1818
        %1820 = vrot.lane.b32.xlu0 %v1729, 32
        %v1821 = vpop.permute.xlu0 %1820
        %1822 = vrot.lane.b32.xlu0 %v1730, 32
        %v1823 = vpop.permute.xlu0 %1822
        %1824 = vrot.lane.b32.xlu0 %v1731, 32
        %v1825 = vpop.permute.xlu0 %1824
        %1826 = vrot.lane.b32.xlu0 %v1732, 32
        %v1827 = vpop.permute.xlu0 %1826
        %1828 = vrot.lane.b32.xlu0 %v1733, 32
        %v1829 = vpop.permute.xlu0 %1828
        %vm1862 = vcmask 294144
        %1863 = vst.msk [vmem:[#allocation2] sm:$0xff] %vm1862, %v1767
        %1864 = vst.msk [vmem:[#allocation2 + $0x8] sm:$0xff] %vm1862, %v1769
        %1865 = vst.msk [vmem:[#allocation2 + $0x10] sm:$0xff] %vm1862, %v1771
        %1866 = vst.msk [vmem:[#allocation2 + $0x18] sm:$0xff] %vm1862, %v1773
        %1867 = vst.msk [vmem:[#allocation2 + $0x20] sm:$0xff] %vm1862, %v1775
        %1868 = vst.msk [vmem:[#allocation2 + $0x28] sm:$0xff] %vm1862, %v1777
        %1869 = vst.msk [vmem:[#allocation2 + $0x30] sm:$0xff] %vm1862, %v1779
        %1870 = vst.msk [vmem:[#allocation2 + $0x38] sm:$0xff] %vm1862, %v1781
        %1871 = vst.msk [vmem:[#allocation2 + $0x40] sm:$0xff] %vm1862, %v1783
        %1872 = vst.msk [vmem:[#allocation2 + $0x48] sm:$0xff] %vm1862, %v1785
        %1873 = vst.msk [vmem:[#allocation2 + $0x50] sm:$0xff] %vm1862, %v1787
        %1874 = vst.msk [vmem:[#allocation2 + $0x58] sm:$0xff] %vm1862, %v1789
        %1875 = vst.msk [vmem:[#allocation2 + $0x60] sm:$0xff] %vm1862, %v1791
        %1876 = vst.msk [vmem:[#allocation2 + $0x68] sm:$0xff] %vm1862, %v1793
        %1877 = vst.msk [vmem:[#allocation2 + $0x70] sm:$0xff] %vm1862, %v1795
        %1878 = vst.msk [vmem:[#allocation2 + $0x78] sm:$0xff] %vm1862, %v1797
        %1879 = vst.msk [vmem:[#allocation2 + $0x80] sm:$0xff] %vm1862, %v1799
        %1880 = vst.msk [vmem:[#allocation2 + $0x88] sm:$0xff] %vm1862, %v1801
        %1881 = vst.msk [vmem:[#allocation2 + $0x90] sm:$0xff] %vm1862, %v1803
        %1882 = vst.msk [vmem:[#allocation2 + $0x98] sm:$0xff] %vm1862, %v1805
        %1883 = vst.msk [vmem:[#allocation2 + $0xa0] sm:$0xff] %vm1862, %v1807
        %1884 = vst.msk [vmem:[#allocation2 + $0xa8] sm:$0xff] %vm1862, %v1809
        %1885 = vst.msk [vmem:[#allocation2 + $0xb0] sm:$0xff] %vm1862, %v1811
        %1886 = vst.msk [vmem:[#allocation2 + $0xb8] sm:$0xff] %vm1862, %v1813
        %1887 = vst.msk [vmem:[#allocation2 + $0xc0] sm:$0xff] %vm1862, %v1815
        %1888 = vst.msk [vmem:[#allocation2 + $0xc8] sm:$0xff] %vm1862, %v1817
        %1889 = vst.msk [vmem:[#allocation2 + $0xd0] sm:$0xff] %vm1862, %v1819
        %1890 = vst.msk [vmem:[#allocation2 + $0xd8] sm:$0xff] %vm1862, %v1821
        %1891 = vst.msk [vmem:[#allocation2 + $0xe0] sm:$0xff] %vm1862, %v1823
        %1892 = vst.msk [vmem:[#allocation2 + $0xe8] sm:$0xff] %vm1862, %v1825
        %1893 = vst.msk [vmem:[#allocation2 + $0xf0] sm:$0xff] %vm1862, %v1827
        %1894 = vst.msk [vmem:[#allocation2 + $0xf8] sm:$0xff] %vm1862, %v1829
      $region36: #{tpu_custom_call.1} parent=31 // pred_fallthru
        _
      %v1895 = vld [vmem:[#allocation2] sm:$0xff]
      %v1896 = vld [vmem:[#allocation2 + $0x8] sm:$0xff]
      %v1897 = vld [vmem:[#allocation2 + $0x10] sm:$0xff]
      %v1898 = vld [vmem:[#allocation2 + $0x18] sm:$0xff]
      %v1899 = vld [vmem:[#allocation2 + $0x20] sm:$0xff]
      %v1900 = vld [vmem:[#allocation2 + $0x28] sm:$0xff]
      %v1901 = vld [vmem:[#allocation2 + $0x30] sm:$0xff]
      %v1902 = vld [vmem:[#allocation2 + $0x38] sm:$0xff]
      %v1903 = vld [vmem:[#allocation2 + $0x40] sm:$0xff]
      %v1904 = vld [vmem:[#allocation2 + $0x48] sm:$0xff]
      %v1905 = vld [vmem:[#allocation2 + $0x50] sm:$0xff]
      %v1906 = vld [vmem:[#allocation2 + $0x58] sm:$0xff]
      %v1907 = vld [vmem:[#allocation2 + $0x60] sm:$0xff]
      %v1908 = vld [vmem:[#allocation2 + $0x68] sm:$0xff]
      %v1909 = vld [vmem:[#allocation2 + $0x70] sm:$0xff]
      %v1910 = vld [vmem:[#allocation2 + $0x78] sm:$0xff]
      %v1911 = vld [vmem:[#allocation2 + $0x80] sm:$0xff]
      %v1912 = vld [vmem:[#allocation2 + $0x88] sm:$0xff]
      %v1913 = vld [vmem:[#allocation2 + $0x90] sm:$0xff]
      %v1914 = vld [vmem:[#allocation2 + $0x98] sm:$0xff]
      %v1915 = vld [vmem:[#allocation2 + $0xa0] sm:$0xff]
      %v1916 = vld [vmem:[#allocation2 + $0xa8] sm:$0xff]
      %v1917 = vld [vmem:[#allocation2 + $0xb0] sm:$0xff]
      %v1918 = vld [vmem:[#allocation2 + $0xb8] sm:$0xff]
      %v1919 = vld [vmem:[#allocation2 + $0xc0] sm:$0xff]
      %v1920 = vld [vmem:[#allocation2 + $0xc8] sm:$0xff]
      %v1921 = vld [vmem:[#allocation2 + $0xd0] sm:$0xff]
      %v1922 = vld [vmem:[#allocation2 + $0xd8] sm:$0xff]
      %v1923 = vld [vmem:[#allocation2 + $0xe0] sm:$0xff]
      %v1924 = vld [vmem:[#allocation2 + $0xe8] sm:$0xff]
      %v1925 = vld [vmem:[#allocation2 + $0xf0] sm:$0xff]
      %v1926 = vld [vmem:[#allocation2 + $0xf8] sm:$0xff]
      %v1927 = vld [vmem:[%s223] sm:$0xff]
      %v1928 = vld [vmem:[%s223 + $0x8] sm:$0xff]
      %v1929 = vld [vmem:[%s223 + $0x10] sm:$0xff]
      %v1930 = vld [vmem:[%s223 + $0x18] sm:$0xff]
      %v1931 = vld [vmem:[%s223 + $0x20] sm:$0xff]
      %v1932 = vld [vmem:[%s223 + $0x28] sm:$0xff]
      %v1933 = vld [vmem:[%s223 + $0x30] sm:$0xff]
      %v1934 = vld [vmem:[%s223 + $0x38] sm:$0xff]
      %v1935 = vld [vmem:[%s223 + $0x40] sm:$0xff]
      %v1936 = vld [vmem:[%s223 + $0x48] sm:$0xff]
      %v1937 = vld [vmem:[%s223 + $0x50] sm:$0xff]
      %v1938 = vld [vmem:[%s223 + $0x58] sm:$0xff]
      %v1939 = vld [vmem:[%s223 + $0x60] sm:$0xff]
      %v1940 = vld [vmem:[%s223 + $0x68] sm:$0xff]
      %v1941 = vld [vmem:[%s223 + $0x70] sm:$0xff]
      %v1942 = vld [vmem:[%s223 + $0x78] sm:$0xff]
      %v1943 = vld [vmem:[%s226] sm:$0x1]
      %v1945 = vperm.slane %v1943, 0
      %1947 = vmatpush.msra.mxu0 %v1942
      %1948 = vmatpush.msra.mxu0 %v1941
      %1949 = vmatpush.msra.mxu0 %v1940
      %1950 = vmatpush.msra.mxu0 %v1939
      %1951 = vmatpush.msra.mxu0 %v1938
      %1952 = vmatpush.msra.mxu0 %v1937
      %1953 = vmatpush.msra.mxu0 %v1936
      %1954 = vmatpush.msra.mxu0 %v1935
      %1955 = vmatpush.msra.mxu0 %v1934
      %1956 = vmatpush.msra.mxu0 %v1933
      %1957 = vmatpush.msra.mxu0 %v1932
      %1958 = vmatpush.msra.mxu0 %v1931
      %1959 = vmatpush.msra.mxu0 %v1930
      %1960 = vmatpush.msra.mxu0 %v1929
      %1961 = vmatpush.msra.mxu0 %v1928
      %1962 = vmatpush.msra.mxu0 %v1927
      %1963 = vmatmul.f32.gmra.mxu0 %v1895
      %v1964 = vpop.f32.mrf.mxu0
      %v1965 = vadd.f32 %v1945, %v1964
      %1966 = vmatmul.f32.gmra.mxu0 %v1896
      %v1967 = vpop.f32.mrf.mxu0
      %v1968 = vadd.f32 %v1945, %v1967
      %1969 = vmatmul.f32.gmra.mxu0 %v1897
      %v1970 = vpop.f32.mrf.mxu0
      %v1971 = vadd.f32 %v1945, %v1970
      %1972 = vmatmul.f32.gmra.mxu0 %v1898
      %v1973 = vpop.f32.mrf.mxu0
      %v1974 = vadd.f32 %v1945, %v1973
      %1975 = vmatmul.f32.gmra.mxu0 %v1899
      %v1976 = vpop.f32.mrf.mxu0
      %v1977 = vadd.f32 %v1945, %v1976
      %1978 = vmatmul.f32.gmra.mxu0 %v1900
      %v1979 = vpop.f32.mrf.mxu0
      %v1980 = vadd.f32 %v1945, %v1979
      %1981 = vmatmul.f32.gmra.mxu0 %v1901
      %v1982 = vpop.f32.mrf.mxu0
      %v1983 = vadd.f32 %v1945, %v1982
      %1984 = vmatmul.f32.gmra.mxu0 %v1902
      %v1985 = vpop.f32.mrf.mxu0
      %v1986 = vadd.f32 %v1945, %v1985
      %1987 = vmatmul.f32.gmra.mxu0 %v1903
      %v1988 = vpop.f32.mrf.mxu0
      %v1989 = vadd.f32 %v1945, %v1988
      %1990 = vmatmul.f32.gmra.mxu0 %v1904
      %v1991 = vpop.f32.mrf.mxu0
      %v1992 = vadd.f32 %v1945, %v1991
      %1993 = vmatmul.f32.gmra.mxu0 %v1905
      %v1994 = vpop.f32.mrf.mxu0
      %v1995 = vadd.f32 %v1945, %v1994
      %1996 = vmatmul.f32.gmra.mxu0 %v1906
      %v1997 = vpop.f32.mrf.mxu0
      %v1998 = vadd.f32 %v1945, %v1997
      %1999 = vmatmul.f32.gmra.mxu0 %v1907
      %v2000 = vpop.f32.mrf.mxu0
      %v2001 = vadd.f32 %v1945, %v2000
      %2002 = vmatmul.f32.gmra.mxu0 %v1908
      %v2003 = vpop.f32.mrf.mxu0
      %v2004 = vadd.f32 %v1945, %v2003
      %2005 = vmatmul.f32.gmra.mxu0 %v1909
      %v2006 = vpop.f32.mrf.mxu0
      %v2007 = vadd.f32 %v1945, %v2006
      %2008 = vmatmul.f32.gmra.mxu0 %v1910
      %v2009 = vpop.f32.mrf.mxu0
      %v2010 = vadd.f32 %v1945, %v2009
      %2011 = vmatmul.f32.gmra.mxu0 %v1911
      %v2012 = vpop.f32.mrf.mxu0
      %v2013 = vadd.f32 %v1945, %v2012
      %2014 = vmatmul.f32.gmra.mxu0 %v1912
      %v2015 = vpop.f32.mrf.mxu0
      %v2016 = vadd.f32 %v1945, %v2015
      %2017 = vmatmul.f32.gmra.mxu0 %v1913
      %v2018 = vpop.f32.mrf.mxu0
      %v2019 = vadd.f32 %v1945, %v2018
      %2020 = vmatmul.f32.gmra.mxu0 %v1914
      %v2021 = vpop.f32.mrf.mxu0
      %v2022 = vadd.f32 %v1945, %v2021
      %2023 = vmatmul.f32.gmra.mxu0 %v1915
      %v2024 = vpop.f32.mrf.mxu0
      %v2025 = vadd.f32 %v1945, %v2024
      %2026 = vmatmul.f32.gmra.mxu0 %v1916
      %v2027 = vpop.f32.mrf.mxu0
      %v2028 = vadd.f32 %v1945, %v2027
      %2029 = vmatmul.f32.gmra.mxu0 %v1917
      %v2030 = vpop.f32.mrf.mxu0
      %v2031 = vadd.f32 %v1945, %v2030
      %2032 = vmatmul.f32.gmra.mxu0 %v1918
      %v2033 = vpop.f32.mrf.mxu0
      %v2034 = vadd.f32 %v1945, %v2033
      %2035 = vmatmul.f32.gmra.mxu0 %v1919
      %v2036 = vpop.f32.mrf.mxu0
      %v2037 = vadd.f32 %v1945, %v2036
      %2038 = vmatmul.f32.gmra.mxu0 %v1920
      %v2039 = vpop.f32.mrf.mxu0
      %v2040 = vadd.f32 %v1945, %v2039
      %2041 = vmatmul.f32.gmra.mxu0 %v1921
      %v2042 = vpop.f32.mrf.mxu0
      %v2043 = vadd.f32 %v1945, %v2042
      %2044 = vmatmul.f32.gmra.mxu0 %v1922
      %v2045 = vpop.f32.mrf.mxu0
      %v2046 = vadd.f32 %v1945, %v2045
      %2047 = vmatmul.f32.gmra.mxu0 %v1923
      %v2048 = vpop.f32.mrf.mxu0
      %v2049 = vadd.f32 %v1945, %v2048
      %2050 = vmatmul.f32.gmra.mxu0 %v1924
      %v2051 = vpop.f32.mrf.mxu0
      %v2052 = vadd.f32 %v1945, %v2051
      %2053 = vmatmul.f32.gmra.mxu0 %v1925
      %v2054 = vpop.f32.mrf.mxu0
      %v2055 = vadd.f32 %v1945, %v2054
      %2056 = vmatmul.f32.gmra.mxu0 %v1926
      %v2057 = vpop.f32.mrf.mxu0
      %v2058 = vadd.f32 %v1945, %v2057
      %2059 = vdwg.mxu0
      %v2060 = vmax.f32 %v1965, 0.0
      %v2061 = vmax.f32 %v1968, 0.0
      %v2062 = vmax.f32 %v1971, 0.0
      %v2063 = vmax.f32 %v1974, 0.0
      %v2064 = vmax.f32 %v1977, 0.0
      %v2065 = vmax.f32 %v1980, 0.0
      %v2066 = vmax.f32 %v1983, 0.0
      %v2067 = vmax.f32 %v1986, 0.0
      %v2068 = vmax.f32 %v1989, 0.0
      %v2069 = vmax.f32 %v1992, 0.0
      %v2070 = vmax.f32 %v1995, 0.0
      %v2071 = vmax.f32 %v1998, 0.0
      %v2072 = vmax.f32 %v2001, 0.0
      %v2073 = vmax.f32 %v2004, 0.0
      %v2074 = vmax.f32 %v2007, 0.0
      %v2075 = vmax.f32 %v2010, 0.0
      %v2076 = vmax.f32 %v2013, 0.0
      %v2077 = vmax.f32 %v2016, 0.0
      %v2078 = vmax.f32 %v2019, 0.0
      %v2079 = vmax.f32 %v2022, 0.0
      %v2080 = vmax.f32 %v2025, 0.0
      %v2081 = vmax.f32 %v2028, 0.0
      %v2082 = vmax.f32 %v2031, 0.0
      %v2083 = vmax.f32 %v2034, 0.0
      %v2084 = vmax.f32 %v2037, 0.0
      %v2085 = vmax.f32 %v2040, 0.0
      %v2086 = vmax.f32 %v2043, 0.0
      %v2087 = vmax.f32 %v2046, 0.0
      %v2088 = vmax.f32 %v2049, 0.0
      %v2089 = vmax.f32 %v2052, 0.0
      %v2090 = vmax.f32 %v2055, 0.0
      %v2091 = vmax.f32 %v2058, 0.0
      %vm2092 = vcmask 64512
      %2093 = vst.msk [vmem:[%s238] sm:$0xff] %vm2092, %v2060
      %2094 = vst.msk [vmem:[%s238 + $0x8] sm:$0xff] %vm2092, %v2061
      %2095 = vst.msk [vmem:[%s238 + $0x10] sm:$0xff] %vm2092, %v2062
      %2096 = vst.msk [vmem:[%s238 + $0x18] sm:$0xff] %vm2092, %v2063
      %2097 = vst.msk [vmem:[%s238 + $0x20] sm:$0xff] %vm2092, %v2064
      %2098 = vst.msk [vmem:[%s238 + $0x28] sm:$0xff] %vm2092, %v2065
      %2099 = vst.msk [vmem:[%s238 + $0x30] sm:$0xff] %vm2092, %v2066
      %2100 = vst.msk [vmem:[%s238 + $0x38] sm:$0xff] %vm2092, %v2067
      %2101 = vst.msk [vmem:[%s238 + $0x40] sm:$0xff] %vm2092, %v2068
      %2102 = vst.msk [vmem:[%s238 + $0x48] sm:$0xff] %vm2092, %v2069
      %2103 = vst.msk [vmem:[%s238 + $0x50] sm:$0xff] %vm2092, %v2070
      %2104 = vst.msk [vmem:[%s238 + $0x58] sm:$0xff] %vm2092, %v2071
      %2105 = vst.msk [vmem:[%s238 + $0x60] sm:$0xff] %vm2092, %v2072
      %2106 = vst.msk [vmem:[%s238 + $0x68] sm:$0xff] %vm2092, %v2073
      %2107 = vst.msk [vmem:[%s238 + $0x70] sm:$0xff] %vm2092, %v2074
      %2108 = vst.msk [vmem:[%s238 + $0x78] sm:$0xff] %vm2092, %v2075
      %2109 = vst.msk [vmem:[%s238 + $0x80] sm:$0xff] %vm2092, %v2076
      %2110 = vst.msk [vmem:[%s238 + $0x88] sm:$0xff] %vm2092, %v2077
      %2111 = vst.msk [vmem:[%s238 + $0x90] sm:$0xff] %vm2092, %v2078
      %2112 = vst.msk [vmem:[%s238 + $0x98] sm:$0xff] %vm2092, %v2079
      %2113 = vst.msk [vmem:[%s238 + $0xa0] sm:$0xff] %vm2092, %v2080
      %2114 = vst.msk [vmem:[%s238 + $0xa8] sm:$0xff] %vm2092, %v2081
      %2115 = vst.msk [vmem:[%s238 + $0xb0] sm:$0xff] %vm2092, %v2082
      %2116 = vst.msk [vmem:[%s238 + $0xb8] sm:$0xff] %vm2092, %v2083
      %2117 = vst.msk [vmem:[%s238 + $0xc0] sm:$0xff] %vm2092, %v2084
      %2118 = vst.msk [vmem:[%s238 + $0xc8] sm:$0xff] %vm2092, %v2085
      %2119 = vst.msk [vmem:[%s238 + $0xd0] sm:$0xff] %vm2092, %v2086
      %2120 = vst.msk [vmem:[%s238 + $0xd8] sm:$0xff] %vm2092, %v2087
      %2121 = vst.msk [vmem:[%s238 + $0xe0] sm:$0xff] %vm2092, %v2088
      %2122 = vst.msk [vmem:[%s238 + $0xe8] sm:$0xff] %vm2092, %v2089
      %2123 = vst.msk [vmem:[%s238 + $0xf0] sm:$0xff] %vm2092, %v2090
      %2124 = vst.msk [vmem:[%s238 + $0xf8] sm:$0xff] %vm2092, %v2091
      %s2125 = smul.u32 32, %s20
      %p2126 = scmp.lt.s32.totalorder %s19, 1
      %s2127 = scalar_select %p2126, %s19, 1
      %p2128 = scmp.lt.s32.totalorder %s2125, 31
      %s2129 = scalar_select %p2128, %s2125, 31
      %p2130 = scmp.lt.s32.totalorder %s21, 0
      %s2131 = scalar_select %p2130, %s21, 0
      %s2132 = sadd.s32 %s2131, %s2129
      %s2133 = smul.addr %s2127, 32
      %s2134 = sadd.s32 %s2132, %s2133
      %s2135 = smul.addr %s2134, 8
      %s2136 = scalar_lea.vmem %s3, %s2135
      // Predicated region
      $region37: #{tpu_custom_call.1} parent=31 // pred_check
        %p2137 = pneg %p133
      $region38: #{tpu_custom_call.1} parent=31 // pred_check_branch
        %2139 = sbr.rel (%p2137) target = $region40
      $region39: #{tpu_custom_call.1} parent=31 // pred_region
        %s2140 = smul.u32 32, %s20
      $region40: #{tpu_custom_call.1} parent=31 // pred_fallthru
        _
    $region32: #{tpu_custom_call.1} parent=5 // pred_fallthru
      _
    %p2141 = scmp.le.s32.totalorder 2, %s9
    // Predicated region
    $region41: #{tpu_custom_call.1} parent=5 // pred_check
      %p2142 = pneg %p2141
    $region42: #{tpu_custom_call.1} parent=5 // pred_check_branch
      %2144 = sbr.rel (%p2142) target = $region44
    $region43: #{tpu_custom_call.1} parent=5 // pred_region
      %s2145 = ssub.s32 %s9, 2
      // Predicated region
      $region45: #{tpu_custom_call.1} parent=43 // pred_check
        %p2146 = pneg %p139
      $region46: #{tpu_custom_call.1} parent=43 // pred_check_branch
        %2148 = sbr.rel (%p2146) target = $region48
      $region47: #{tpu_custom_call.1} parent=43 // pred_region
        %s2149 = smul.u32 32, %s23
        %p2150 = scmp.lt.s32.totalorder %s22, 1
        %s2151 = scalar_select %p2150, %s22, 1
        %p2152 = scmp.lt.s32.totalorder %s2149, 31
        %s2153 = scalar_select %p2152, %s2149, 31
        %p2154 = scmp.lt.s32.totalorder %s24, 0
        %s2155 = scalar_select %p2154, %s24, 0
        %s2156 = sadd.s32 %s2155, %s2153
        %s2157 = smul.addr %s2151, 32
        %s2158 = sadd.s32 %s2156, %s2157
        %s2159 = smul.addr %s2158, 8
        %s2160 = scalar_lea.vmem %s3, %s2159
      $region48: #{tpu_custom_call.1} parent=43 // pred_fallthru
        _
    $region44: #{tpu_custom_call.1} parent=5 // pred_fallthru
      _
  $region6: #{tpu_custom_call.1} parent=0 // loop_footer
    %s13 = sadd.s32 1, %s9
  $region7: #{tpu_custom_call.1} parent=0 // loop_footer_branch
    %8 = sbr.rel target = $region3
  $region8: #{tpu_custom_call.1} parent=0 // loop_exit
    _

</llo_original>
